<compile_context>
chip_gen: v5e
topology: v5e:2x2
jax: 0.10.0
libtpu: 0.0.40
codegen_flags: <defaults>
</compile_context>

<pallas_src>
import functools

import jax
import jax.numpy as jnp
import numpy as np
from jax.experimental import pallas as pl
from jax.experimental.pallas import tpu as pltpu


# ----------------------------- fused Pallas kernel -----------------------------


def _fused_encoder_kernel(
    tok_ref, pos_ref, kbias_ref,
    wqkv_ref, bqkv_ref, wo_ref, bo_ref,
    ln1g_ref, ln1b_ref,
    w1_ref, b1_ref, w2_ref, b2_ref,
    ln2g_ref, ln2b_ref,
    o_ref,
    x_scr,
    *, n_heads, head_dim, emb_scale, eps,
):
    """One grid step = (batch element b, layer l).  x is carried in VMEM scratch."""
    l = pl.program_id(1)

    # layer 0: build the embedded input for this batch row (tok * sqrt(E) + pos).
    @pl.when(l == 0)
    def _():
        x_scr[...] = tok_ref[...] * emb_scale + pos_ref[...]

    x = x_scr[...]                                   # (S, E) f32
    S, E = x.shape
    H, D = n_heads, head_dim
    inv_sqrt_d = 1.0 / (float(D) ** 0.5)

    # ---- multi-head self-attention: heads batched in one contraction ------------
    xb = jnp.broadcast_to(x[None], (H, S, E))        # (H, S, E)
    qkv = jnp.einsum('hse,hef->hsf', xb, wqkv_ref[...],
                     preferred_element_type=jnp.float32) + bqkv_ref[...]   # (H,S,3D)
    q = qkv[:, :, 0 * D:1 * D]
    k = qkv[:, :, 1 * D:2 * D]
    v = qkv[:, :, 2 * D:3 * D]

    s = jnp.einsum('hqd,hkd->hqk', q, k,
                   preferred_element_type=jnp.float32) * inv_sqrt_d
    s = s + kbias_ref[...]                           # (1,S) key-padding bias -> (H,S,S)
    s = s - jnp.max(s, axis=-1, keepdims=True)
    p = jnp.exp(s)
    p = p * pl.reciprocal(jnp.sum(p, axis=-1, keepdims=True), approx=True)
    o_h = jnp.einsum('hqk,hkd->hqd', p, v,
                     preferred_element_type=jnp.float32)                   # (H,S,D)

    # output projection with the head merge folded in:  sum_h (o_h[h] @ Wo[h])
    attn = jnp.sum(jnp.einsum('hqd,hde->hqe', o_h, wo_ref[...],
                              preferred_element_type=jnp.float32), axis=0)
    attn = attn + bo_ref[...]                        # (S, E)

    # ---- add & norm 1 ------------------------------------------------------------
    y = x + attn
    mu = jnp.mean(y, axis=-1, keepdims=True)
    var = jnp.mean((y - mu) ** 2, axis=-1, keepdims=True)
    y = (y - mu) * jax.lax.rsqrt(var + eps) * ln1g_ref[...] + ln1b_ref[...]

    # ---- feed forward ------------------------------------------------------------
    h1 = jnp.dot(y, w1_ref[...], preferred_element_type=jnp.float32) + b1_ref[...]
    h1 = jnp.maximum(h1, 0.0)                        # relu
    ffn = jnp.dot(h1, w2_ref[...], preferred_element_type=jnp.float32) + b2_ref[...]

    # ---- add & norm 2 ------------------------------------------------------------
    z = y + ffn
    mu2 = jnp.mean(z, axis=-1, keepdims=True)
    var2 = jnp.mean((z - mu2) ** 2, axis=-1, keepdims=True)
    z = (z - mu2) * jax.lax.rsqrt(var2 + eps) * ln2g_ref[...] + ln2b_ref[...]

    x_scr[...] = z                                   # carry to next layer

    @pl.when(l == pl.num_programs(1) - 1)
    def _():
        o_ref[...] = z.astype(o_ref.dtype)           # single HBM writeback per batch row


# ----------------------------- BlockSpec helpers --------------------------------


def _stacked_spec(*trailing):
    """Per-layer stacked param (L, *trailing): pick layer l, full trailing block."""
    n = len(trailing)

    def imap(b, l):
        return (l,) + (0,) * n
    return pl.BlockSpec((None,) + tuple(trailing), imap)


def _batched_spec(*trailing):
    """Per-batch array (B, *trailing): pick batch b, full trailing block."""
    n = len(trailing)

    def imap(b, l):
        return (b,) + (0,) * n
    return pl.BlockSpec((None,) + tuple(trailing), imap)


def _shared_spec(*shape):
    """Whole array, same block every grid step (fetched once)."""
    n = len(shape)

    def imap(b, l):
        return (0,) * n
    return pl.BlockSpec(tuple(shape), imap)


# ----------------------------- wrapper -------------------------------------------


def transformer_encoder_forward(src, src_mask, params, n_heads):
    """src: (S, B) int32 tokens, src_mask: (B, S) bool (True = pad).
    Returns (S, B, E) float32, matching PyTorch nn.TransformerEncoder output."""
    S, B = src.shape
    E = params['tok_emb'].shape[1]
    H = n_heads
    D = E // H
    kp = params['kernel']
    L = kp['w1'].shape[0]
    F = kp['w1'].shape[2]

    # glue: embedding gathers (no clean in-kernel gather at this layout) + mask bias.
    tok = jnp.take(params['tok_emb'], src.T, axis=0)                 # (B, S, E)
    pos = params['pos_emb'][:S]                                      # (S, E)
    kbias = jnp.where(src_mask, -1e9, 0.0).astype(jnp.float32)[:, None, :]   # (B, 1, S)

    in_specs = [
        _batched_spec(S, E),            # tok
        _shared_spec(S, E),             # pos
        _batched_spec(1, S),            # key padding bias
        _stacked_spec(H, E, 3 * D),     # wqkv (head-split)
        _stacked_spec(H, 1, 3 * D),     # bqkv
        _stacked_spec(H, D, E),         # wo   (head-split)
        _stacked_spec(1, E),            # bo
        _stacked_spec(1, E),            # ln1 gamma
        _stacked_spec(1, E),            # ln1 beta
        _stacked_spec(E, F),            # w1
        _stacked_spec(1, F),            # b1
        _stacked_spec(F, E),            # w2
        _stacked_spec(1, E),            # b2
        _stacked_spec(1, E),            # ln2 gamma
        _stacked_spec(1, E),            # ln2 beta
    ]
    out_specs = _batched_spec(S, E)

    out = pl.pallas_call(
        functools.partial(_fused_encoder_kernel, n_heads=H, head_dim=D,
                          emb_scale=float(E) ** 0.5, eps=1e-5),
        out_shape=jax.ShapeDtypeStruct((B, S, E), jnp.float32),
        grid_spec=pltpu.PrefetchScalarGridSpec(
            num_scalar_prefetch=0,
            grid=(B, L),                              # layer axis innermost (carry)
            in_specs=in_specs,
            out_specs=out_specs,
            scratch_shapes=[pltpu.VMEM((S, E), jnp.float32)],
        ),
        compiler_params=pltpu.CompilerParams(
            dimension_semantics=("parallel", "arbitrary")),
    )(tok, pos, kbias,
      kp['wqkv'], kp['bqkv'], kp['wo'], kp['bo'],
      kp['ln1_g'], kp['ln1_b'],
      kp['w1'], kp['b1'], kp['w2'], kp['b2'],
      kp['ln2_g'], kp['ln2_b'])

    return jnp.transpose(out, (1, 0, 2))              # (S, B, E)


# ----------------------------- host-side weight re-layout ------------------------


def prepare_kernel_params(layers, n_heads):
    """Free host/XLA-side re-layout: split heads and stack layers so the kernel can
    batch the head contraction with zero in-kernel transposes."""
    E = layers[0]['wqkv_t'].shape[0]
    F = layers[0]['w1_t'].shape[1]
    H = n_heads
    D = E // H

    def split_heads(p):
        w = p['wqkv_t']                                            # (E, 3E)
        wq = w[:, 0 * E:1 * E].reshape(E, H, D)
        wk = w[:, 1 * E:2 * E].reshape(E, H, D)
        wv = w[:, 2 * E:3 * E].reshape(E, H, D)
        wqkv = jnp.transpose(jnp.concatenate([wq, wk, wv], -1), (1, 0, 2))   # (H,E,3D)
        b = p['bqkv']                                              # (3E,)
        bq = b[0 * E:1 * E].reshape(H, D)
        bk = b[1 * E:2 * E].reshape(H, D)
        bv = b[2 * E:3 * E].reshape(H, D)
        bqkv = jnp.concatenate([bq, bk, bv], -1)[:, None, :]       # (H,1,3D)
        wo = p['wo_t'].reshape(H, D, E)                            # (H,D,E)
        return wqkv, bqkv, wo

    heads = [split_heads(p) for p in layers]

    def stack(name, shape=None):
        arrs = [p[name] for p in layers]
        if shape is not None:
            arrs = [a.reshape(shape) for a in arrs]
        return jnp.stack(arrs)

    return {
        'wqkv': jnp.stack([h[0] for h in heads]),      # (L, H, E, 3D)
        'bqkv': jnp.stack([h[1] for h in heads]),      # (L, H, 1, 3D)
        'wo':   jnp.stack([h[2] for h in heads]),      # (L, H, D, E)
        'bo':   stack('bo', (1, E)),                   # (L, 1, E)
        'ln1_g': stack('ln1_g', (1, E)),
        'ln1_b': stack('ln1_b', (1, E)),
        'w1':   stack('w1_t'),                         # (L, E, F)
        'b1':   stack('b1', (1, F)),                   # (L, 1, F)
        'w2':   stack('w2_t'),                         # (L, F, E)
        'b2':   stack('b2', (1, E)),
        'ln2_g': stack('ln2_g', (1, E)),
        'ln2_b': stack('ln2_b', (1, E)),
    }


# ----------------------------- pure-JAX reference --------------------------------


def _reference_forward(src, src_mask, params, n_heads):
    S, B = src.shape
    E = params['tok_emb'].shape[1]
    scale = float(E) ** 0.5
    x = jnp.take(params['tok_emb'], src.T, axis=0) * scale + params['pos_emb'][:S][None]
    mask_bias = jnp.where(src_mask, -1e9, 0.0)[:, None, :]
    D = E // n_heads

    def ln(v, g, b):
        mu = jnp.mean(v, -1, keepdims=True)
        var = jnp.mean((v - mu) ** 2, -1, keepdims=True)
        return (v - mu) * jax.lax.rsqrt(var + 1e-5) * g + b

    for p in params['layers']:
        qkv = x @ p['wqkv_t'] + p['bqkv']
        q, k, v = jnp.split(qkv, 3, axis=-1)
        outs = []
        for h in range(n_heads):
            sl = slice(h * D, (h + 1) * D)
            s = jnp.einsum('bqd,bkd->bqk', q[..., sl], k[..., sl]) / (D ** 0.5)
            s = s + mask_bias
            pr = jax.nn.softmax(s, axis=-1)
            outs.append(jnp.einsum('bqk,bkd->bqd', pr, v[..., sl]))
        attn = jnp.concatenate(outs, -1) @ p['wo_t'] + p['bo']
        x = ln(x + attn, p['ln1_g'], p['ln1_b'])
        ffn = jnp.maximum(x @ p['w1_t'] + p['b1'], 0.0) @ p['w2_t'] + p['b2']
        x = ln(x + ffn, p['ln2_g'], p['ln2_b'])
    return jnp.transpose(x, (1, 0, 2))


# ----------------------------- param init ----------------------------------------


def _init_layer(key, emb_dim, ff_dim):
    k = jax.random.split(key, 12)

    def rnd(kk, shape, s):
        return s * jax.random.normal(kk, shape, jnp.float32)

    return {
        'wqkv_t': rnd(k[0], (emb_dim, 3 * emb_dim), 0.05),
        'bqkv':   rnd(k[1], (3 * emb_dim,), 0.02),
        'wo_t':   rnd(k[2], (emb_dim, emb_dim), 0.05),
        'bo':     rnd(k[3], (emb_dim,), 0.02),
        'ln1_g':  1.0 + rnd(k[4], (emb_dim,), 0.05),
        'ln1_b':  rnd(k[5], (emb_dim,), 0.02),
        'w1_t':   rnd(k[6], (emb_dim, ff_dim), 0.05),
        'b1':     rnd(k[7], (ff_dim,), 0.02),
        'w2_t':   rnd(k[8], (ff_dim, emb_dim), 0.05),
        'b2':     rnd(k[9], (emb_dim,), 0.02),
        'ln2_g':  1.0 + rnd(k[10], (emb_dim,), 0.05),
        'ln2_b':  rnd(k[11], (emb_dim,), 0.02),
    }


def init_params(key, vocab, emb_dim, max_len, ff_dim, n_heads, n_layers):
    keys = jax.random.split(key, 2 + n_layers)
    layers = [_init_layer(keys[2 + l], emb_dim, ff_dim) for l in range(n_layers)]
    params = {
        'tok_emb': 0.02 * jax.random.normal(keys[0], (vocab, emb_dim), jnp.float32),
        'pos_emb': 0.02 * jax.random.normal(keys[1], (max_len, emb_dim), jnp.float32),
        'layers': layers,
        'kernel': prepare_kernel_params(layers, n_heads),
    }
    return params


# ----------------------------- main -----------------------------------------------


if __name__ == "__main__":
    # Transformer_Encoder(input_dim=50, emb_dim=32, max_len=16, ff_dim=64,
    #                     n_heads=4, n_layers=2, dropout=0.0)
    vocab, emb_dim, max_len, ff_dim, n_heads, n_layers = 50, 32, 16, 64, 4, 2
    seq_len, batch = 8, 2

    key = jax.random.PRNGKey(0)
    k_param, k_tok = jax.random.split(key)
    params = init_params(k_param, vocab, emb_dim, max_len, ff_dim, n_heads, n_layers)

    src = jax.random.randint(k_tok, (seq_len, batch), 0, vocab, dtype=jnp.int32)   # (S, B)
    # key padding mask (B, S): True = padded position (last 2 positions of batch 1)
    src_mask = jnp.zeros((batch, seq_len), dtype=bool).at[1, -2:].set(True)

    fwd = jax.jit(lambda s, m: transformer_encoder_forward(s, m, params, n_heads))
    out = jax.block_until_ready(fwd(src, src_mask))
    assert out.shape == (seq_len, batch, emb_dim)

    ref = jax.block_until_ready(_reference_forward(src, src_mask, params, n_heads))
    # tolerance leaves a little room for the approx-reciprocal softmax normalization
    np.testing.assert_allclose(np.asarray(out), np.asarray(ref), rtol=5e-3, atol=5e-3)

    print("KERNEL_OK")
</pallas_src>

<mosaic_0001>
module attributes {stable_mosaic.version = 11 : i64} {
  func.func @_fused_encoder_kernel(%arg0: i32, %arg1: i32, %arg2: memref<1x8x32xf32, #tpu.memory_space<vmem>>, %arg3: memref<8x32xf32, #tpu.memory_space<vmem>>, %arg4: memref<1x1x8xf32, #tpu.memory_space<vmem>>, %arg5: memref<1x4x32x24xf32, #tpu.memory_space<vmem>>, %arg6: memref<1x4x1x24xf32, #tpu.memory_space<vmem>>, %arg7: memref<1x4x8x32xf32, #tpu.memory_space<vmem>>, %arg8: memref<1x1x32xf32, #tpu.memory_space<vmem>>, %arg9: memref<1x1x32xf32, #tpu.memory_space<vmem>>, %arg10: memref<1x1x32xf32, #tpu.memory_space<vmem>>, %arg11: memref<1x32x64xf32, #tpu.memory_space<vmem>>, %arg12: memref<1x1x64xf32, #tpu.memory_space<vmem>>, %arg13: memref<1x64x32xf32, #tpu.memory_space<vmem>>, %arg14: memref<1x1x32xf32, #tpu.memory_space<vmem>>, %arg15: memref<1x1x32xf32, #tpu.memory_space<vmem>>, %arg16: memref<1x1x32xf32, #tpu.memory_space<vmem>>, %arg17: memref<1x8x32xf32, #tpu.memory_space<vmem>>, %arg18: memref<8x32xf32, #tpu.memory_space<vmem>>) attributes {dimension_semantics = [#tpu.dimension_semantics<parallel>, #tpu.dimension_semantics<arbitrary>], iteration_bounds = array<i64: 2, 2>, scalar_prefetch = 0 : i64, scratch_operands = 1 : i64, tpu.core_type = #tpu.core_type<tc>, window_params = [{transform_indices = @transform_0, window_bounds = array<i64: 1, 8, 32>}, {pipeline_mode = #tpu.pipeline_mode<synchronous>, transform_indices = @transform_1, window_bounds = array<i64: 8, 32>}, {transform_indices = @transform_2, window_bounds = array<i64: 1, 1, 8>}, {transform_indices = @transform_3, window_bounds = array<i64: 1, 4, 32, 24>}, {transform_indices = @transform_4, window_bounds = array<i64: 1, 4, 1, 24>}, {transform_indices = @transform_5, window_bounds = array<i64: 1, 4, 8, 32>}, {transform_indices = @transform_6, window_bounds = array<i64: 1, 1, 32>}, {transform_indices = @transform_7, window_bounds = array<i64: 1, 1, 32>}, {transform_indices = @transform_8, window_bounds = array<i64: 1, 1, 32>}, {transform_indices = @transform_9, window_bounds = array<i64: 1, 32, 64>}, {transform_indices = @transform_10, window_bounds = array<i64: 1, 1, 64>}, {transform_indices = @transform_11, window_bounds = array<i64: 1, 64, 32>}, {transform_indices = @transform_12, window_bounds = array<i64: 1, 1, 32>}, {transform_indices = @transform_13, window_bounds = array<i64: 1, 1, 32>}, {transform_indices = @transform_14, window_bounds = array<i64: 1, 1, 32>}, {transform_indices = @transform_15, window_bounds = array<i64: 1, 8, 32>}]} {
    %c0_i32 = arith.constant 0 : i32
    %0 = arith.cmpi eq, %arg1, %c0_i32 : i32
    %1 = arith.extui %0 : i1 to i32
    %c0_i32_0 = arith.constant 0 : i32
    %2 = arith.cmpi ne, %1, %c0_i32_0 : i32
    scf.if %2 {
      %c0_67 = arith.constant 0 : index
      %c0_68 = arith.constant 0 : index
      %c0_69 = arith.constant 0 : index
      %118 = vector.load %arg2[%c0_67, %c0_68, %c0_69] : memref<1x8x32xf32, #tpu.memory_space<vmem>>, vector<1x8x32xf32>
      %119 = vector.shape_cast %118 : vector<1x8x32xf32> to vector<8x32xf32>
      %cst_70 = arith.constant 5.65685415 : f32
      %120 = vector.broadcast %cst_70 : f32 to vector<8x32xf32>
      %121 = arith.mulf %119, %120 : vector<8x32xf32>
      %c0_71 = arith.constant 0 : index
      %c0_72 = arith.constant 0 : index
      %122 = vector.load %arg3[%c0_71, %c0_72] : memref<8x32xf32, #tpu.memory_space<vmem>>, vector<8x32xf32>
      %123 = arith.addf %121, %122 : vector<8x32xf32>
      %c0_73 = arith.constant 0 : index
      %c0_74 = arith.constant 0 : index
      %124 = vector.load %arg18[%c0_73, %c0_74] : memref<8x32xf32, #tpu.memory_space<vmem>>, vector<8x32xf32>
      tpu.vector_store %arg18[%c0_73, %c0_74], %123 {strides = array<i32>} : memref<8x32xf32, #tpu.memory_space<vmem>>, vector<8x32xf32>,
    } else {
    }
    %c0 = arith.constant 0 : index
    %c0_1 = arith.constant 0 : index
    %3 = vector.load %arg18[%c0, %c0_1] : memref<8x32xf32, #tpu.memory_space<vmem>>, vector<8x32xf32>
    %4 = vector.shape_cast %3 : vector<8x32xf32> to vector<1x8x32xf32>
    %5 = vector.shape_cast %4 : vector<1x8x32xf32> to vector<1x8x32xf32>
    %6 = vector.broadcast %5 : vector<1x8x32xf32> to vector<4x8x32xf32>
    %c0_2 = arith.constant 0 : index
    %c0_3 = arith.constant 0 : index
    %c0_4 = arith.constant 0 : index
    %c0_5 = arith.constant 0 : index
    %7 = vector.load %arg5[%c0_2, %c0_3, %c0_4, %c0_5] : memref<1x4x32x24xf32, #tpu.memory_space<vmem>>, vector<1x4x32x24xf32>
    %8 = vector.shape_cast %7 : vector<1x4x32x24xf32> to vector<4x32x24xf32>
    "tpu.trace_start"() <{level = 10 : i32, message = "hse,hef->hsf"}> : () -> ()
    %cst = arith.constant dense<0.000000e+00> : vector<4x8x24xf32>
    %9 = tpu.matmul %6, %8, %cst {dimension_numbers = #tpu.dot_dimension_numbers<[2], [1], [1], [2], [0, 0, 0, 1, 1, 2], [0], [0]>} : vector<4x8x32xf32>, vector<4x32x24xf32>, vector<4x8x24xf32> -> vector<4x8x24xf32>
    "tpu.trace_stop"() : () -> ()
    %c0_6 = arith.constant 0 : index
    %c0_7 = arith.constant 0 : index
    %c0_8 = arith.constant 0 : index
    %c0_9 = arith.constant 0 : index
    %10 = vector.load %arg6[%c0_6, %c0_7, %c0_8, %c0_9] : memref<1x4x1x24xf32, #tpu.memory_space<vmem>>, vector<1x4x1x24xf32>
    %11 = vector.shape_cast %10 : vector<1x4x1x24xf32> to vector<4x1x24xf32>
    %12 = vector.broadcast %11 : vector<4x1x24xf32> to vector<4x8x24xf32>
    %13 = arith.addf %9, %12 : vector<4x8x24xf32>
    %14 = vector.extract_strided_slice %13 {offsets = [0, 0, 0], sizes = [4, 8, 8], strides = [1, 1, 1]} : vector<4x8x24xf32> to vector<4x8x8xf32>
    %15 = vector.extract_strided_slice %13 {offsets = [0, 0, 8], sizes = [4, 8, 8], strides = [1, 1, 1]} : vector<4x8x24xf32> to vector<4x8x8xf32>
    %16 = vector.extract_strided_slice %13 {offsets = [0, 0, 16], sizes = [4, 8, 8], strides = [1, 1, 1]} : vector<4x8x24xf32> to vector<4x8x8xf32>
    "tpu.trace_start"() <{level = 10 : i32, message = "hqd,hkd->hqk"}> : () -> ()
    %cst_10 = arith.constant dense<0.000000e+00> : vector<4x8x8xf32>
    %17 = tpu.matmul %14, %15, %cst_10 {dimension_numbers = #tpu.dot_dimension_numbers<[2], [2], [1], [1], [0, 0, 0, 1, 1, 1], [0], [0]>} : vector<4x8x8xf32>, vector<4x8x8xf32>, vector<4x8x8xf32> -> vector<4x8x8xf32>
    "tpu.trace_stop"() : () -> ()
    %cst_11 = arith.constant 0.353553385 : f32
    %18 = vector.broadcast %cst_11 : f32 to vector<4x8x8xf32>
    %19 = arith.mulf %17, %18 : vector<4x8x8xf32>
    %c0_12 = arith.constant 0 : index
    %c0_13 = arith.constant 0 : index
    %c0_14 = arith.constant 0 : index
    %20 = vector.load %arg4[%c0_12, %c0_13, %c0_14] : memref<1x1x8xf32, #tpu.memory_space<vmem>>, vector<1x1x8xf32>
    %21 = vector.shape_cast %20 : vector<1x1x8xf32> to vector<1x8xf32>
    %22 = vector.shape_cast %21 : vector<1x8xf32> to vector<1x1x8xf32>
    %23 = vector.broadcast %22 : vector<1x1x8xf32> to vector<4x8x8xf32>
    %24 = arith.addf %19, %23 : vector<4x8x8xf32>
    %cst_15 = arith.constant dense<0xFF800000> : vector<4x8xf32>
    %25 = vector.multi_reduction <maximumf>, %24, %cst_15 [2] : vector<4x8x8xf32> to vector<4x8xf32>
    %26 = vector.shape_cast %25 : vector<4x8xf32> to vector<4x8x1xf32>
    %27 = vector.broadcast %26 : vector<4x8x1xf32> to vector<4x8x8xf32>
    %28 = arith.subf %24, %27 : vector<4x8x8xf32>
    %29 = math.exp %28 : vector<4x8x8xf32>
    %cst_16 = arith.constant dense<0.000000e+00> : vector<4x8xf32>
    %30 = vector.multi_reduction <add>, %29, %cst_16 [2] : vector<4x8x8xf32> to vector<4x8xf32>
    %31 = vector.shape_cast %30 : vector<4x8xf32> to vector<4x8x1xf32>
    %32 = tpu.reciprocal %31 {approx = true} : vector<4x8x1xf32> -> vector<4x8x1xf32>
    %33 = vector.broadcast %32 : vector<4x8x1xf32> to vector<4x8x8xf32>
    %34 = arith.mulf %29, %33 : vector<4x8x8xf32>
    "tpu.trace_start"() <{level = 10 : i32, message = "hqk,hkd->hqd"}> : () -> ()
    %cst_17 = arith.constant dense<0.000000e+00> : vector<4x8x8xf32>
    %35 = tpu.matmul %34, %16, %cst_17 {dimension_numbers = #tpu.dot_dimension_numbers<[2], [1], [1], [2], [0, 0, 0, 1, 1, 2], [0], [0]>} : vector<4x8x8xf32>, vector<4x8x8xf32>, vector<4x8x8xf32> -> vector<4x8x8xf32>
    "tpu.trace_stop"() : () -> ()
    %c0_18 = arith.constant 0 : index
    %c0_19 = arith.constant 0 : index
    %c0_20 = arith.constant 0 : index
    %c0_21 = arith.constant 0 : index
    %36 = vector.load %arg7[%c0_18, %c0_19, %c0_20, %c0_21] : memref<1x4x8x32xf32, #tpu.memory_space<vmem>>, vector<1x4x8x32xf32>
    %37 = vector.shape_cast %36 : vector<1x4x8x32xf32> to vector<4x8x32xf32>
    "tpu.trace_start"() <{level = 10 : i32, message = "hqd,hde->hqe"}> : () -> ()
    %cst_22 = arith.constant dense<0.000000e+00> : vector<4x8x32xf32>
    %38 = tpu.matmul %35, %37, %cst_22 {dimension_numbers = #tpu.dot_dimension_numbers<[2], [1], [1], [2], [0, 0, 0, 1, 1, 2], [0], [0]>} : vector<4x8x8xf32>, vector<4x8x32xf32>, vector<4x8x32xf32> -> vector<4x8x32xf32>
    "tpu.trace_stop"() : () -> ()
    %cst_23 = arith.constant dense<0.000000e+00> : vector<8x32xf32>
    %39 = vector.multi_reduction <add>, %38, %cst_23 [0] : vector<4x8x32xf32> to vector<8x32xf32>
    %c0_24 = arith.constant 0 : index
    %c0_25 = arith.constant 0 : index
    %c0_26 = arith.constant 0 : index
    %40 = vector.load %arg8[%c0_24, %c0_25, %c0_26] : memref<1x1x32xf32, #tpu.memory_space<vmem>>, vector<1x1x32xf32>
    %41 = vector.shape_cast %40 : vector<1x1x32xf32> to vector<1x32xf32>
    %42 = vector.broadcast %41 : vector<1x32xf32> to vector<8x32xf32>
    %43 = arith.addf %39, %42 : vector<8x32xf32>
    %44 = arith.addf %3, %43 : vector<8x32xf32>
    %cst_27 = arith.constant dense<0.000000e+00> : vector<8xf32>
    %45 = vector.multi_reduction <add>, %44, %cst_27 [1] : vector<8x32xf32> to vector<8xf32>
    %46 = vector.shape_cast %45 : vector<8xf32> to vector<8x1xf32>
    %cst_28 = arith.constant 3.200000e+01 : f32
    %47 = vector.broadcast %cst_28 : f32 to vector<8x1xf32>
    %48 = arith.divf %46, %47 : vector<8x1xf32>
    %49 = vector.broadcast %48 : vector<8x1xf32> to vector<8x32xf32>
    %50 = arith.subf %44, %49 : vector<8x32xf32>
    %51 = arith.mulf %50, %50 : vector<8x32xf32>
    %cst_29 = arith.constant dense<0.000000e+00> : vector<8xf32>
    %52 = vector.multi_reduction <add>, %51, %cst_29 [1] : vector<8x32xf32> to vector<8xf32>
    %53 = vector.shape_cast %52 : vector<8xf32> to vector<8x1xf32>
    %cst_30 = arith.constant 3.200000e+01 : f32
    %54 = vector.broadcast %cst_30 : f32 to vector<8x1xf32>
    %55 = arith.divf %53, %54 : vector<8x1xf32>
    %56 = vector.broadcast %48 : vector<8x1xf32> to vector<8x32xf32>
    %57 = arith.subf %44, %56 : vector<8x32xf32>
    %cst_31 = arith.constant 9.99999974E-6 : f32
    %58 = vector.broadcast %cst_31 : f32 to vector<8x1xf32>
    %59 = arith.addf %55, %58 : vector<8x1xf32>
    %60 = math.rsqrt %59 : vector<8x1xf32>
    %61 = vector.broadcast %60 : vector<8x1xf32> to vector<8x32xf32>
    %62 = arith.mulf %57, %61 : vector<8x32xf32>
    %c0_32 = arith.constant 0 : index
    %c0_33 = arith.constant 0 : index
    %c0_34 = arith.constant 0 : index
    %63 = vector.load %arg9[%c0_32, %c0_33, %c0_34] : memref<1x1x32xf32, #tpu.memory_space<vmem>>, vector<1x1x32xf32>
    %64 = vector.shape_cast %63 : vector<1x1x32xf32> to vector<1x32xf32>
    %65 = vector.broadcast %64 : vector<1x32xf32> to vector<8x32xf32>
    %66 = arith.mulf %62, %65 : vector<8x32xf32>
    %c0_35 = arith.constant 0 : index
    %c0_36 = arith.constant 0 : index
    %c0_37 = arith.constant 0 : index
    %67 = vector.load %arg10[%c0_35, %c0_36, %c0_37] : memref<1x1x32xf32, #tpu.memory_space<vmem>>, vector<1x1x32xf32>
    %68 = vector.shape_cast %67 : vector<1x1x32xf32> to vector<1x32xf32>
    %69 = vector.broadcast %68 : vector<1x32xf32> to vector<8x32xf32>
    %70 = arith.addf %66, %69 : vector<8x32xf32>
    %c0_38 = arith.constant 0 : index
    %c0_39 = arith.constant 0 : index
    %c0_40 = arith.constant 0 : index
    %71 = vector.load %arg11[%c0_38, %c0_39, %c0_40] : memref<1x32x64xf32, #tpu.memory_space<vmem>>, vector<1x32x64xf32>
    %72 = vector.shape_cast %71 : vector<1x32x64xf32> to vector<32x64xf32>
    %cst_41 = arith.constant dense<0.000000e+00> : vector<8x64xf32>
    %73 = tpu.matmul %70, %72, %cst_41 {dimension_numbers = #tpu.dot_dimension_numbers<[1], [0], [0], [1], [0, 0, 1, 1], [], []>} : vector<8x32xf32>, vector<32x64xf32>, vector<8x64xf32> -> vector<8x64xf32>
    %c0_42 = arith.constant 0 : index
    %c0_43 = arith.constant 0 : index
    %c0_44 = arith.constant 0 : index
    %74 = vector.load %arg12[%c0_42, %c0_43, %c0_44] : memref<1x1x64xf32, #tpu.memory_space<vmem>>, vector<1x1x64xf32>
    %75 = vector.shape_cast %74 : vector<1x1x64xf32> to vector<1x64xf32>
    %76 = vector.broadcast %75 : vector<1x64xf32> to vector<8x64xf32>
    %77 = arith.addf %73, %76 : vector<8x64xf32>
    %cst_45 = arith.constant 0.000000e+00 : f32
    %78 = vector.broadcast %cst_45 : f32 to vector<8x64xf32>
    %79 = arith.maximumf %77, %78 : vector<8x64xf32>
    %c0_46 = arith.constant 0 : index
    %c0_47 = arith.constant 0 : index
    %c0_48 = arith.constant 0 : index
    %80 = vector.load %arg13[%c0_46, %c0_47, %c0_48] : memref<1x64x32xf32, #tpu.memory_space<vmem>>, vector<1x64x32xf32>
    %81 = vector.shape_cast %80 : vector<1x64x32xf32> to vector<64x32xf32>
    %cst_49 = arith.constant dense<0.000000e+00> : vector<8x32xf32>
    %82 = tpu.matmul %79, %81, %cst_49 {dimension_numbers = #tpu.dot_dimension_numbers<[1], [0], [0], [1], [0, 0, 1, 1], [], []>} : vector<8x64xf32>, vector<64x32xf32>, vector<8x32xf32> -> vector<8x32xf32>
    %c0_50 = arith.constant 0 : index
    %c0_51 = arith.constant 0 : index
    %c0_52 = arith.constant 0 : index
    %83 = vector.load %arg14[%c0_50, %c0_51, %c0_52] : memref<1x1x32xf32, #tpu.memory_space<vmem>>, vector<1x1x32xf32>
    %84 = vector.shape_cast %83 : vector<1x1x32xf32> to vector<1x32xf32>
    %85 = vector.broadcast %84 : vector<1x32xf32> to vector<8x32xf32>
    %86 = arith.addf %82, %85 : vector<8x32xf32>
    %87 = arith.addf %70, %86 : vector<8x32xf32>
    %cst_53 = arith.constant dense<0.000000e+00> : vector<8xf32>
    %88 = vector.multi_reduction <add>, %87, %cst_53 [1] : vector<8x32xf32> to vector<8xf32>
    %89 = vector.shape_cast %88 : vector<8xf32> to vector<8x1xf32>
    %cst_54 = arith.constant 3.200000e+01 : f32
    %90 = vector.broadcast %cst_54 : f32 to vector<8x1xf32>
    %91 = arith.divf %89, %90 : vector<8x1xf32>
    %92 = vector.broadcast %91 : vector<8x1xf32> to vector<8x32xf32>
    %93 = arith.subf %87, %92 : vector<8x32xf32>
    %94 = arith.mulf %93, %93 : vector<8x32xf32>
    %cst_55 = arith.constant dense<0.000000e+00> : vector<8xf32>
    %95 = vector.multi_reduction <add>, %94, %cst_55 [1] : vector<8x32xf32> to vector<8xf32>
    %96 = vector.shape_cast %95 : vector<8xf32> to vector<8x1xf32>
    %cst_56 = arith.constant 3.200000e+01 : f32
    %97 = vector.broadcast %cst_56 : f32 to vector<8x1xf32>
    %98 = arith.divf %96, %97 : vector<8x1xf32>
    %99 = vector.broadcast %91 : vector<8x1xf32> to vector<8x32xf32>
    %100 = arith.subf %87, %99 : vector<8x32xf32>
    %cst_57 = arith.constant 9.99999974E-6 : f32
    %101 = vector.broadcast %cst_57 : f32 to vector<8x1xf32>
    %102 = arith.addf %98, %101 : vector<8x1xf32>
    %103 = math.rsqrt %102 : vector<8x1xf32>
    %104 = vector.broadcast %103 : vector<8x1xf32> to vector<8x32xf32>
    %105 = arith.mulf %100, %104 : vector<8x32xf32>
    %c0_58 = arith.constant 0 : index
    %c0_59 = arith.constant 0 : index
    %c0_60 = arith.constant 0 : index
    %106 = vector.load %arg15[%c0_58, %c0_59, %c0_60] : memref<1x1x32xf32, #tpu.memory_space<vmem>>, vector<1x1x32xf32>
    %107 = vector.shape_cast %106 : vector<1x1x32xf32> to vector<1x32xf32>
    %108 = vector.broadcast %107 : vector<1x32xf32> to vector<8x32xf32>
    %109 = arith.mulf %105, %108 : vector<8x32xf32>
    %c0_61 = arith.constant 0 : index
    %c0_62 = arith.constant 0 : index
    %c0_63 = arith.constant 0 : index
    %110 = vector.load %arg16[%c0_61, %c0_62, %c0_63] : memref<1x1x32xf32, #tpu.memory_space<vmem>>, vector<1x1x32xf32>
    %111 = vector.shape_cast %110 : vector<1x1x32xf32> to vector<1x32xf32>
    %112 = vector.broadcast %111 : vector<1x32xf32> to vector<8x32xf32>
    %113 = arith.addf %109, %112 : vector<8x32xf32>
    %c0_64 = arith.constant 0 : index
    %c0_65 = arith.constant 0 : index
    %114 = vector.load %arg18[%c0_64, %c0_65] : memref<8x32xf32, #tpu.memory_space<vmem>>, vector<8x32xf32>
    tpu.vector_store %arg18[%c0_64, %c0_65], %113 {strides = array<i32>} : memref<8x32xf32, #tpu.memory_space<vmem>>, vector<8x32xf32>,
    %c1_i32 = arith.constant 1 : i32
    %115 = arith.cmpi eq, %arg1, %c1_i32 : i32
    %116 = arith.extui %115 : i1 to i32
    %c0_i32_66 = arith.constant 0 : i32
    %117 = arith.cmpi ne, %116, %c0_i32_66 : i32
    scf.if %117 {
      %c0_67 = arith.constant 0 : index
      %c0_68 = arith.constant 0 : index
      %c0_69 = arith.constant 0 : index
      %118 = vector.load %arg17[%c0_67, %c0_68, %c0_69] : memref<1x8x32xf32, #tpu.memory_space<vmem>>, vector<1x8x32xf32>
      %119 = vector.shape_cast %118 : vector<1x8x32xf32> to vector<8x32xf32>
      %120 = vector.shape_cast %113 : vector<8x32xf32> to vector<1x8x32xf32>
      tpu.vector_store %arg17[%c0_67, %c0_68, %c0_69], %120 {strides = array<i32>} : memref<1x8x32xf32, #tpu.memory_space<vmem>>, vector<1x8x32xf32>,
    } else {
    }
    return
  }
  func.func @transform_0(%arg0: i32, %arg1: i32) -> (i32, i32, i32) {
    %c0_i32 = arith.constant 0 : i32
    %c0_i32_0 = arith.constant 0 : i32
    %c0_i32_1 = arith.constant 0 : i32
    return %arg0, %c0_i32, %c0_i32_0 : i32, i32, i32
  }
  func.func @transform_1(%arg0: i32, %arg1: i32) -> (i32, i32) {
    %c0_i32 = arith.constant 0 : i32
    %c0_i32_0 = arith.constant 0 : i32
    %c0_i32_1 = arith.constant 0 : i32
    return %c0_i32, %c0_i32_0 : i32, i32
  }
  func.func @transform_2(%arg0: i32, %arg1: i32) -> (i32, i32, i32) {
    %c0_i32 = arith.constant 0 : i32
    %c0_i32_0 = arith.constant 0 : i32
    %c0_i32_1 = arith.constant 0 : i32
    return %arg0, %c0_i32, %c0_i32_0 : i32, i32, i32
  }
  func.func @transform_3(%arg0: i32, %arg1: i32) -> (i32, i32, i32, i32) {
    %c0_i32 = arith.constant 0 : i32
    %c0_i32_0 = arith.constant 0 : i32
    %c0_i32_1 = arith.constant 0 : i32
    %c0_i32_2 = arith.constant 0 : i32
    return %arg1, %c0_i32, %c0_i32_0, %c0_i32_1 : i32, i32, i32, i32
  }
  func.func @transform_4(%arg0: i32, %arg1: i32) -> (i32, i32, i32, i32) {
    %c0_i32 = arith.constant 0 : i32
    %c0_i32_0 = arith.constant 0 : i32
    %c0_i32_1 = arith.constant 0 : i32
    %c0_i32_2 = arith.constant 0 : i32
    return %arg1, %c0_i32, %c0_i32_0, %c0_i32_1 : i32, i32, i32, i32
  }
  func.func @transform_5(%arg0: i32, %arg1: i32) -> (i32, i32, i32, i32) {
    %c0_i32 = arith.constant 0 : i32
    %c0_i32_0 = arith.constant 0 : i32
    %c0_i32_1 = arith.constant 0 : i32
    %c0_i32_2 = arith.constant 0 : i32
    return %arg1, %c0_i32, %c0_i32_0, %c0_i32_1 : i32, i32, i32, i32
  }
  func.func @transform_6(%arg0: i32, %arg1: i32) -> (i32, i32, i32) {
    %c0_i32 = arith.constant 0 : i32
    %c0_i32_0 = arith.constant 0 : i32
    %c0_i32_1 = arith.constant 0 : i32
    return %arg1, %c0_i32, %c0_i32_0 : i32, i32, i32
  }
  func.func @transform_7(%arg0: i32, %arg1: i32) -> (i32, i32, i32) {
    %c0_i32 = arith.constant 0 : i32
    %c0_i32_0 = arith.constant 0 : i32
    %c0_i32_1 = arith.constant 0 : i32
    return %arg1, %c0_i32, %c0_i32_0 : i32, i32, i32
  }
  func.func @transform_8(%arg0: i32, %arg1: i32) -> (i32, i32, i32) {
    %c0_i32 = arith.constant 0 : i32
    %c0_i32_0 = arith.constant 0 : i32
    %c0_i32_1 = arith.constant 0 : i32
    return %arg1, %c0_i32, %c0_i32_0 : i32, i32, i32
  }
  func.func @transform_9(%arg0: i32, %arg1: i32) -> (i32, i32, i32) {
    %c0_i32 = arith.constant 0 : i32
    %c0_i32_0 = arith.constant 0 : i32
    %c0_i32_1 = arith.constant 0 : i32
    return %arg1, %c0_i32, %c0_i32_0 : i32, i32, i32
  }
  func.func @transform_10(%arg0: i32, %arg1: i32) -> (i32, i32, i32) {
    %c0_i32 = arith.constant 0 : i32
    %c0_i32_0 = arith.constant 0 : i32
    %c0_i32_1 = arith.constant 0 : i32
    return %arg1, %c0_i32, %c0_i32_0 : i32, i32, i32
  }
  func.func @transform_11(%arg0: i32, %arg1: i32) -> (i32, i32, i32) {
    %c0_i32 = arith.constant 0 : i32
    %c0_i32_0 = arith.constant 0 : i32
    %c0_i32_1 = arith.constant 0 : i32
    return %arg1, %c0_i32, %c0_i32_0 : i32, i32, i32
  }
  func.func @transform_12(%arg0: i32, %arg1: i32) -> (i32, i32, i32) {
    %c0_i32 = arith.constant 0 : i32
    %c0_i32_0 = arith.constant 0 : i32
    %c0_i32_1 = arith.constant 0 : i32
    return %arg1, %c0_i32, %c0_i32_0 : i32, i32, i32
  }
  func.func @transform_13(%arg0: i32, %arg1: i32) -> (i32, i32, i32) {
    %c0_i32 = arith.constant 0 : i32
    %c0_i32_0 = arith.constant 0 : i32
    %c0_i32_1 = arith.constant 0 : i32
    return %arg1, %c0_i32, %c0_i32_0 : i32, i32, i32
  }
  func.func @transform_14(%arg0: i32, %arg1: i32) -> (i32, i32, i32) {
    %c0_i32 = arith.constant 0 : i32
    %c0_i32_0 = arith.constant 0 : i32
    %c0_i32_1 = arith.constant 0 : i32
    return %arg1, %c0_i32, %c0_i32_0 : i32, i32, i32
  }
  func.func @transform_15(%arg0: i32, %arg1: i32) -> (i32, i32, i32) {
    %c0_i32 = arith.constant 0 : i32
    %c0_i32_0 = arith.constant 0 : i32
    %c0_i32_1 = arith.constant 0 : i32
    return %arg0, %c0_i32, %c0_i32_0 : i32, i32, i32
  }
}

</mosaic_0001>

<llo_original>
// kernel: _lambda_.1
$region0: #{_lambda_.1}
  #allocation0 [shape = 'u32[]', space=smem, size = 0x4, offset = 0x4, fixed_abs, tag = 'smem constant byte address 0x4 - core index']
  #allocation1 [shape = 'u32[72,128]{1,0:T(1,128)}', space=vmem, size = 0x9000, scoped, tag = 'internal scratch']
  #allocation2 [shape = 'f32[8,32]{1,0:T(8,128)}', space=vmem, size = 0x1000, scoped, tag = 'scratch operand']
  %s0 = inlined_call_operand.vmem [shape: f32[2,8,32], index: 0, kind: input, shape index: {}]
  %s1 = inlined_call_operand.vmem [shape: f32[8,32], index: 1, kind: input, shape index: {}]
  %s2 = inlined_call_operand.vmem [shape: f32[2,1,8], index: 2, kind: input, shape index: {}]
  %s3 = inlined_call_operand.hbm [shape: f32[2,4,32,24], index: 3, kind: input, shape index: {}]
  %s4 = inlined_call_operand.vmem [shape: f32[2,4,1,24], index: 4, kind: input, shape index: {}]
  %s5 = inlined_call_operand.vmem [shape: f32[2,4,8,32], index: 5, kind: input, shape index: {}]
  %s6 = inlined_call_operand.vmem [shape: f32[2,1,32], index: 6, kind: input, shape index: {}]
  %s7 = inlined_call_operand.hbm [shape: f32[2,1,32], index: 7, kind: input, shape index: {}]
  %s8 = inlined_call_operand.hbm [shape: f32[2,1,32], index: 8, kind: input, shape index: {}]
  %s9 = inlined_call_operand.hbm [shape: f32[2,32,64], index: 9, kind: input, shape index: {}]
  %s10 = inlined_call_operand.hbm [shape: f32[2,1,64], index: 10, kind: input, shape index: {}]
  %s11 = inlined_call_operand.vmem [shape: f32[2,64,32], index: 11, kind: input, shape index: {}]
  %s12 = inlined_call_operand.hbm [shape: f32[2,1,32], index: 12, kind: input, shape index: {}]
  %s13 = inlined_call_operand.hbm [shape: f32[2,1,32], index: 13, kind: input, shape index: {}]
  %s14 = inlined_call_operand.hbm [shape: f32[2,1,32], index: 14, kind: input, shape index: {}]
  %s15 = inlined_call_operand.vmem [shape: f32[2,8,32], index: 15, kind: output, shape index: {}]
  %s16 = sld [smem:[#allocation0]]
  $region133: #{_lambda_.1} parent=0
    _
  %s18 = ssub.s32 1, %s16
  %s19 = scalar_select 0, %s18, %s16
  $region1: #{_lambda_.1} parent=0
    #allocation3 [shape = 'u8[131072]{0}', space=vmem, size = 0x20000, scoped, tag = 'input window, operand 3']
    #allocation4 [shape = 's32[2]{0}', space=sflag, size = 0x8, scoped, tag = 'scoped memory for _lambda_.1']
    #allocation5 [shape = 'u8[1024]{0}', space=vmem, size = 0x400, scoped, tag = 'input window, operand 7']
    #allocation6 [shape = 's32[2]{0}', space=sflag, size = 0x8, scoped, tag = 'scoped memory for _lambda_.1']
    #allocation7 [shape = 'u8[1024]{0}', space=vmem, size = 0x400, scoped, tag = 'input window, operand 8']
    #allocation8 [shape = 'u8[32768]{0}', space=vmem, size = 0x8000, scoped, tag = 'input window, operand 9']
    #allocation9 [shape = 's32[2]{0}', space=sflag, size = 0x8, scoped, tag = 'scoped memory for _lambda_.1']
    #allocation10 [shape = 'u8[1024]{0}', space=vmem, size = 0x400, scoped, tag = 'input window, operand 10']
    #allocation11 [shape = 'u8[1024]{0}', space=vmem, size = 0x400, scoped, tag = 'input window, operand 12']
    #allocation12 [shape = 's32[2]{0}', space=sflag, size = 0x8, scoped, tag = 'scoped memory for _lambda_.1']
    #allocation13 [shape = 'u8[1024]{0}', space=vmem, size = 0x400, scoped, tag = 'input window, operand 13']
    #allocation14 [shape = 'u8[1024]{0}', space=vmem, size = 0x400, scoped, tag = 'input window, operand 14']
    #allocation15 [shape = 's32[2]{0}', space=sflag, size = 0x8, scoped, tag = 'scoped memory for _lambda_.1']
    %20 = vsyncpa [#allocation4], 0
    %s21 = scalar_lea.sflag [#allocation4], 1
    %22 = vsyncpa %s21, 0
    %23 = vsyncpa [#allocation6], 0
    %s24 = scalar_lea.sflag [#allocation6], 1
    %25 = vsyncpa %s24, 0
    %26 = vsyncpa [#allocation9], 0
    %s27 = scalar_lea.sflag [#allocation9], 1
    %28 = vsyncpa %s27, 0
    %29 = vsyncpa [#allocation12], 0
    %s30 = scalar_lea.sflag [#allocation12], 1
    %31 = vsyncpa %s30, 0
    %32 = vsyncpa [#allocation15], 0
    %s33 = scalar_lea.sflag [#allocation15], 1
    %34 = vsyncpa %s33, 0
    loop: start=0, step=1, limit=6
    $region2: #{_lambda_.1} parent=1 // loop_pre_header
      _
    $region3: #{_lambda_.1} parent=1 // loop_header
      %s36 = sphi 0, %s40
      %p37 = scmp.ge.s32.totalorder %s36, 6
      %s43 = sphi 0, %s55
      %s44 = sphi 0, %s51
      %s45 = sphi 0, %s43
      %s46 = sphi 0, %s44
      %s47 = sphi 0, %s45
      %s48 = sphi 0, %s46
      %s58 = sphi 0, %s60
      %s61 = sphi 0, %s58
      %s62 = sphi 0, %s61
      %s78 = sphi 0, %s62
      %s82 = sphi 0, %s82
      %s84 = sphi 0, %s82
      %s85 = sphi 0, %s84
      %s99 = sphi 0, %s85
      %s105 = sphi 0, %s107
      %s108 = sphi 0, %s105
      %s109 = sphi 0, %s108
      %s125 = sphi 0, %s109
      %s131 = sphi 0, %s133
      %s134 = sphi 0, %s131
      %s135 = sphi 0, %s134
      %s151 = sphi 0, %s135
      %s157 = sphi 0, %s159
      %s160 = sphi 0, %s157
      %s161 = sphi 0, %s160
      %s177 = sphi 0, %s161
      %s183 = sphi 0, %s185
      %s186 = sphi 0, %s183
      %s187 = sphi 0, %s186
      %s203 = sphi 0, %s187
      %s209 = sphi 0, %s211
      %s212 = sphi 0, %s209
      %s213 = sphi 0, %s212
      %s229 = sphi 0, %s213
      %s235 = sphi 0, %s237
      %s238 = sphi 0, %s235
      %s239 = sphi 0, %s238
      %s255 = sphi 0, %s239
      %s261 = sphi 0, %s263
      %s264 = sphi 0, %s261
      %s265 = sphi 0, %s264
      %s281 = sphi 0, %s265
      %s287 = sphi 0, %s289
      %s290 = sphi 0, %s287
      %s291 = sphi 0, %s290
      %s307 = sphi 0, %s291
      %s313 = sphi 0, %s315
      %s316 = sphi 0, %s313
      %s317 = sphi 0, %s316
      %s333 = sphi 0, %s317
      %s339 = sphi 0, %s341
      %s342 = sphi 0, %s339
      %s343 = sphi 0, %s342
      %s359 = sphi 0, %s343
      %s365 = sphi 0, %s367
      %s368 = sphi 0, %s365
      %s369 = sphi 0, %s368
      %s385 = sphi 0, %s369
      %s391 = sphi 0, %s393
      %s394 = sphi 0, %s391
      %s395 = sphi 0, %s394
      %s411 = sphi 0, %s395
      %s417 = sphi 0, %s419
      %s420 = sphi 0, %s417
      %s421 = sphi 0, %s420
      %s437 = sphi 0, %s421
      %s443 = sphi 0, %s445
      %s446 = sphi 0, %s443
      %s447 = sphi 0, %s446
      %s463 = sphi 0, %s447
    $region4: #{_lambda_.1} parent=1 // loop_header_branch
      %39 = sbr.rel (%p37) target = $region8
    $region5: #{_lambda_.1} parent=1 // loop_body
      %s41 = ssub.s32 %s36, 1
      %s42 = ssub.s32 %s36, 2
      %s49 = sadd.s32 1, %s44
      %p50 = scmp.ge.s32.totalorder %s49, 2
      %s51 = scalar_select %p50, 0, %s49
      %s52 = sadd.s32 1, %s43
      %s53 = scalar_select %p50, %s52, %s43
      %p54 = scmp.ge.s32.totalorder %s53, 2
      %s55 = scalar_select %p54, 0, %s53
      %s56 = ssub.s32 %s43, %s55
      %p57 = scmp.eq.s32.totalorder %s56, 0
      %s59 = sadd.s32 %s58, 1
      %s60 = scalar_select %p57, %s58, %s59
      %p63 = pneg %p57
      %p64 = scmp.eq.s32.totalorder %s36, 3
      %p65 = por %p63, %p64
      %p66 = scmp.ne.s32.totalorder %s58, %s61
      %p67 = scmp.eq.s32.totalorder %s36, 0
      %p68 = por %p66, %p67
      %p69 = scmp.ne.s32.totalorder %s58, %s61
      %p70 = scmp.eq.s32.totalorder %s41, 3
      %p71 = por %p69, %p70
      %p72 = scmp.ne.s32.totalorder %s61, %s62
      %p73 = scmp.eq.s32.totalorder %s41, 0
      %p74 = por %p72, %p73
      %p75 = scmp.ne.s32.totalorder %s61, %s62
      %p76 = scmp.eq.s32.totalorder %s42, 3
      %p77 = por %p75, %p76
      %p79 = scmp.ne.s32.totalorder %s62, %s78
      %p80 = scmp.eq.s32.totalorder %s42, 0
      %p81 = por %p79, %p80
      %s83 = sadd.s32 %s82, 1
      %p86 = scmp.eq.s32.totalorder %s36, 3
      %p87 = scmp.ne.s32.totalorder %s82, %s84
      %p88 = scmp.eq.s32.totalorder %s36, 0
      %p89 = por %p87, %p88
      %p90 = scmp.ne.s32.totalorder %s82, %s84
      %p91 = scmp.eq.s32.totalorder %s41, 3
      %p92 = por %p90, %p91
      %p93 = scmp.ne.s32.totalorder %s84, %s85
      %p94 = scmp.eq.s32.totalorder %s41, 0
      %p95 = por %p93, %p94
      %p96 = scmp.ne.s32.totalorder %s84, %s85
      %p97 = scmp.eq.s32.totalorder %s42, 3
      %p98 = por %p96, %p97
      %p100 = scmp.ne.s32.totalorder %s85, %s99
      %p101 = scmp.eq.s32.totalorder %s42, 0
      %p102 = por %p100, %p101
      %s103 = ssub.s32 %s43, %s55
      %p104 = scmp.eq.s32.totalorder %s103, 0
      %s106 = sadd.s32 %s105, 1
      %s107 = scalar_select %p104, %s105, %s106
      %p110 = pneg %p104
      %p111 = scmp.eq.s32.totalorder %s36, 3
      %p112 = por %p110, %p111
      %p113 = scmp.ne.s32.totalorder %s105, %s108
      %p114 = scmp.eq.s32.totalorder %s36, 0
      %p115 = por %p113, %p114
      %p116 = scmp.ne.s32.totalorder %s105, %s108
      %p117 = scmp.eq.s32.totalorder %s41, 3
      %p118 = por %p116, %p117
      %p119 = scmp.ne.s32.totalorder %s108, %s109
      %p120 = scmp.eq.s32.totalorder %s41, 0
      %p121 = por %p119, %p120
      %p122 = scmp.ne.s32.totalorder %s108, %s109
      %p123 = scmp.eq.s32.totalorder %s42, 3
      %p124 = por %p122, %p123
      %p126 = scmp.ne.s32.totalorder %s109, %s125
      %p127 = scmp.eq.s32.totalorder %s42, 0
      %p128 = por %p126, %p127
      %s129 = ssub.s32 %s44, %s51
      %p130 = scmp.eq.s32.totalorder %s129, 0
      %s132 = sadd.s32 %s131, 1
      %s133 = scalar_select %p130, %s131, %s132
      %p136 = pneg %p130
      %p137 = scmp.eq.s32.totalorder %s36, 3
      %p138 = por %p136, %p137
      %p139 = scmp.ne.s32.totalorder %s131, %s134
      %p140 = scmp.eq.s32.totalorder %s36, 0
      %p141 = por %p139, %p140
      %p142 = scmp.ne.s32.totalorder %s131, %s134
      %p143 = scmp.eq.s32.totalorder %s41, 3
      %p144 = por %p142, %p143
      %p145 = scmp.ne.s32.totalorder %s134, %s135
      %p146 = scmp.eq.s32.totalorder %s41, 0
      %p147 = por %p145, %p146
      %p148 = scmp.ne.s32.totalorder %s134, %s135
      %p149 = scmp.eq.s32.totalorder %s42, 3
      %p150 = por %p148, %p149
      %p152 = scmp.ne.s32.totalorder %s135, %s151
      %p153 = scmp.eq.s32.totalorder %s42, 0
      %p154 = por %p152, %p153
      %s155 = ssub.s32 %s44, %s51
      %p156 = scmp.eq.s32.totalorder %s155, 0
      %s158 = sadd.s32 %s157, 1
      %s159 = scalar_select %p156, %s157, %s158
      %p162 = pneg %p156
      %p163 = scmp.eq.s32.totalorder %s36, 3
      %p164 = por %p162, %p163
      %p165 = scmp.ne.s32.totalorder %s157, %s160
      %p166 = scmp.eq.s32.totalorder %s36, 0
      %p167 = por %p165, %p166
      %p168 = scmp.ne.s32.totalorder %s157, %s160
      %p169 = scmp.eq.s32.totalorder %s41, 3
      %p170 = por %p168, %p169
      %p171 = scmp.ne.s32.totalorder %s160, %s161
      %p172 = scmp.eq.s32.totalorder %s41, 0
      %p173 = por %p171, %p172
      %p174 = scmp.ne.s32.totalorder %s160, %s161
      %p175 = scmp.eq.s32.totalorder %s42, 3
      %p176 = por %p174, %p175
      %p178 = scmp.ne.s32.totalorder %s161, %s177
      %p179 = scmp.eq.s32.totalorder %s42, 0
      %p180 = por %p178, %p179
      %s181 = ssub.s32 %s44, %s51
      %p182 = scmp.eq.s32.totalorder %s181, 0
      %s184 = sadd.s32 %s183, 1
      %s185 = scalar_select %p182, %s183, %s184
      %p188 = pneg %p182
      %p189 = scmp.eq.s32.totalorder %s36, 3
      %p190 = por %p188, %p189
      %p191 = scmp.ne.s32.totalorder %s183, %s186
      %p192 = scmp.eq.s32.totalorder %s36, 0
      %p193 = por %p191, %p192
      %p194 = scmp.ne.s32.totalorder %s183, %s186
      %p195 = scmp.eq.s32.totalorder %s41, 3
      %p196 = por %p194, %p195
      %p197 = scmp.ne.s32.totalorder %s186, %s187
      %p198 = scmp.eq.s32.totalorder %s41, 0
      %p199 = por %p197, %p198
      %p200 = scmp.ne.s32.totalorder %s186, %s187
      %p201 = scmp.eq.s32.totalorder %s42, 3
      %p202 = por %p200, %p201
      %p204 = scmp.ne.s32.totalorder %s187, %s203
      %p205 = scmp.eq.s32.totalorder %s42, 0
      %p206 = por %p204, %p205
      %s207 = ssub.s32 %s44, %s51
      %p208 = scmp.eq.s32.totalorder %s207, 0
      %s210 = sadd.s32 %s209, 1
      %s211 = scalar_select %p208, %s209, %s210
      %p214 = pneg %p208
      %p215 = scmp.eq.s32.totalorder %s36, 3
      %p216 = por %p214, %p215
      %p217 = scmp.ne.s32.totalorder %s209, %s212
      %p218 = scmp.eq.s32.totalorder %s36, 0
      %p219 = por %p217, %p218
      %p220 = scmp.ne.s32.totalorder %s209, %s212
      %p221 = scmp.eq.s32.totalorder %s41, 3
      %p222 = por %p220, %p221
      %p223 = scmp.ne.s32.totalorder %s212, %s213
      %p224 = scmp.eq.s32.totalorder %s41, 0
      %p225 = por %p223, %p224
      %p226 = scmp.ne.s32.totalorder %s212, %s213
      %p227 = scmp.eq.s32.totalorder %s42, 3
      %p228 = por %p226, %p227
      %p230 = scmp.ne.s32.totalorder %s213, %s229
      %p231 = scmp.eq.s32.totalorder %s42, 0
      %p232 = por %p230, %p231
      %s233 = ssub.s32 %s44, %s51
      %p234 = scmp.eq.s32.totalorder %s233, 0
      %s236 = sadd.s32 %s235, 1
      %s237 = scalar_select %p234, %s235, %s236
      %p240 = pneg %p234
      %p241 = scmp.eq.s32.totalorder %s36, 3
      %p242 = por %p240, %p241
      %p243 = scmp.ne.s32.totalorder %s235, %s238
      %p244 = scmp.eq.s32.totalorder %s36, 0
      %p245 = por %p243, %p244
      %p246 = scmp.ne.s32.totalorder %s235, %s238
      %p247 = scmp.eq.s32.totalorder %s41, 3
      %p248 = por %p246, %p247
      %p249 = scmp.ne.s32.totalorder %s238, %s239
      %p250 = scmp.eq.s32.totalorder %s41, 0
      %p251 = por %p249, %p250
      %p252 = scmp.ne.s32.totalorder %s238, %s239
      %p253 = scmp.eq.s32.totalorder %s42, 3
      %p254 = por %p252, %p253
      %p256 = scmp.ne.s32.totalorder %s239, %s255
      %p257 = scmp.eq.s32.totalorder %s42, 0
      %p258 = por %p256, %p257
      %s259 = ssub.s32 %s44, %s51
      %p260 = scmp.eq.s32.totalorder %s259, 0
      %s262 = sadd.s32 %s261, 1
      %s263 = scalar_select %p260, %s261, %s262
      %p266 = pneg %p260
      %p267 = scmp.eq.s32.totalorder %s36, 3
      %p268 = por %p266, %p267
      %p269 = scmp.ne.s32.totalorder %s261, %s264
      %p270 = scmp.eq.s32.totalorder %s36, 0
      %p271 = por %p269, %p270
      %p272 = scmp.ne.s32.totalorder %s261, %s264
      %p273 = scmp.eq.s32.totalorder %s41, 3
      %p274 = por %p272, %p273
      %p275 = scmp.ne.s32.totalorder %s264, %s265
      %p276 = scmp.eq.s32.totalorder %s41, 0
      %p277 = por %p275, %p276
      %p278 = scmp.ne.s32.totalorder %s264, %s265
      %p279 = scmp.eq.s32.totalorder %s42, 3
      %p280 = por %p278, %p279
      %p282 = scmp.ne.s32.totalorder %s265, %s281
      %p283 = scmp.eq.s32.totalorder %s42, 0
      %p284 = por %p282, %p283
      %s285 = ssub.s32 %s44, %s51
      %p286 = scmp.eq.s32.totalorder %s285, 0
      %s288 = sadd.s32 %s287, 1
      %s289 = scalar_select %p286, %s287, %s288
      %p292 = pneg %p286
      %p293 = scmp.eq.s32.totalorder %s36, 3
      %p294 = por %p292, %p293
      %p295 = scmp.ne.s32.totalorder %s287, %s290
      %p296 = scmp.eq.s32.totalorder %s36, 0
      %p297 = por %p295, %p296
      %p298 = scmp.ne.s32.totalorder %s287, %s290
      %p299 = scmp.eq.s32.totalorder %s41, 3
      %p300 = por %p298, %p299
      %p301 = scmp.ne.s32.totalorder %s290, %s291
      %p302 = scmp.eq.s32.totalorder %s41, 0
      %p303 = por %p301, %p302
      %p304 = scmp.ne.s32.totalorder %s290, %s291
      %p305 = scmp.eq.s32.totalorder %s42, 3
      %p306 = por %p304, %p305
      %p308 = scmp.ne.s32.totalorder %s291, %s307
      %p309 = scmp.eq.s32.totalorder %s42, 0
      %p310 = por %p308, %p309
      %s311 = ssub.s32 %s44, %s51
      %p312 = scmp.eq.s32.totalorder %s311, 0
      %s314 = sadd.s32 %s313, 1
      %s315 = scalar_select %p312, %s313, %s314
      %p318 = pneg %p312
      %p319 = scmp.eq.s32.totalorder %s36, 3
      %p320 = por %p318, %p319
      %p321 = scmp.ne.s32.totalorder %s313, %s316
      %p322 = scmp.eq.s32.totalorder %s36, 0
      %p323 = por %p321, %p322
      %p324 = scmp.ne.s32.totalorder %s313, %s316
      %p325 = scmp.eq.s32.totalorder %s41, 3
      %p326 = por %p324, %p325
      %p327 = scmp.ne.s32.totalorder %s316, %s317
      %p328 = scmp.eq.s32.totalorder %s41, 0
      %p329 = por %p327, %p328
      %p330 = scmp.ne.s32.totalorder %s316, %s317
      %p331 = scmp.eq.s32.totalorder %s42, 3
      %p332 = por %p330, %p331
      %p334 = scmp.ne.s32.totalorder %s317, %s333
      %p335 = scmp.eq.s32.totalorder %s42, 0
      %p336 = por %p334, %p335
      %s337 = ssub.s32 %s44, %s51
      %p338 = scmp.eq.s32.totalorder %s337, 0
      %s340 = sadd.s32 %s339, 1
      %s341 = scalar_select %p338, %s339, %s340
      %p344 = pneg %p338
      %p345 = scmp.eq.s32.totalorder %s36, 3
      %p346 = por %p344, %p345
      %p347 = scmp.ne.s32.totalorder %s339, %s342
      %p348 = scmp.eq.s32.totalorder %s36, 0
      %p349 = por %p347, %p348
      %p350 = scmp.ne.s32.totalorder %s339, %s342
      %p351 = scmp.eq.s32.totalorder %s41, 3
      %p352 = por %p350, %p351
      %p353 = scmp.ne.s32.totalorder %s342, %s343
      %p354 = scmp.eq.s32.totalorder %s41, 0
      %p355 = por %p353, %p354
      %p356 = scmp.ne.s32.totalorder %s342, %s343
      %p357 = scmp.eq.s32.totalorder %s42, 3
      %p358 = por %p356, %p357
      %p360 = scmp.ne.s32.totalorder %s343, %s359
      %p361 = scmp.eq.s32.totalorder %s42, 0
      %p362 = por %p360, %p361
      %s363 = ssub.s32 %s44, %s51
      %p364 = scmp.eq.s32.totalorder %s363, 0
      %s366 = sadd.s32 %s365, 1
      %s367 = scalar_select %p364, %s365, %s366
      %p370 = pneg %p364
      %p371 = scmp.eq.s32.totalorder %s36, 3
      %p372 = por %p370, %p371
      %p373 = scmp.ne.s32.totalorder %s365, %s368
      %p374 = scmp.eq.s32.totalorder %s36, 0
      %p375 = por %p373, %p374
      %p376 = scmp.ne.s32.totalorder %s365, %s368
      %p377 = scmp.eq.s32.totalorder %s41, 3
      %p378 = por %p376, %p377
      %p379 = scmp.ne.s32.totalorder %s368, %s369
      %p380 = scmp.eq.s32.totalorder %s41, 0
      %p381 = por %p379, %p380
      %p382 = scmp.ne.s32.totalorder %s368, %s369
      %p383 = scmp.eq.s32.totalorder %s42, 3
      %p384 = por %p382, %p383
      %p386 = scmp.ne.s32.totalorder %s369, %s385
      %p387 = scmp.eq.s32.totalorder %s42, 0
      %p388 = por %p386, %p387
      %s389 = ssub.s32 %s44, %s51
      %p390 = scmp.eq.s32.totalorder %s389, 0
      %s392 = sadd.s32 %s391, 1
      %s393 = scalar_select %p390, %s391, %s392
      %p396 = pneg %p390
      %p397 = scmp.eq.s32.totalorder %s36, 3
      %p398 = por %p396, %p397
      %p399 = scmp.ne.s32.totalorder %s391, %s394
      %p400 = scmp.eq.s32.totalorder %s36, 0
      %p401 = por %p399, %p400
      %p402 = scmp.ne.s32.totalorder %s391, %s394
      %p403 = scmp.eq.s32.totalorder %s41, 3
      %p404 = por %p402, %p403
      %p405 = scmp.ne.s32.totalorder %s394, %s395
      %p406 = scmp.eq.s32.totalorder %s41, 0
      %p407 = por %p405, %p406
      %p408 = scmp.ne.s32.totalorder %s394, %s395
      %p409 = scmp.eq.s32.totalorder %s42, 3
      %p410 = por %p408, %p409
      %p412 = scmp.ne.s32.totalorder %s395, %s411
      %p413 = scmp.eq.s32.totalorder %s42, 0
      %p414 = por %p412, %p413
      %s415 = ssub.s32 %s44, %s51
      %p416 = scmp.eq.s32.totalorder %s415, 0
      %s418 = sadd.s32 %s417, 1
      %s419 = scalar_select %p416, %s417, %s418
      %p422 = pneg %p416
      %p423 = scmp.eq.s32.totalorder %s36, 3
      %p424 = por %p422, %p423
      %p425 = scmp.ne.s32.totalorder %s417, %s420
      %p426 = scmp.eq.s32.totalorder %s36, 0
      %p427 = por %p425, %p426
      %p428 = scmp.ne.s32.totalorder %s417, %s420
      %p429 = scmp.eq.s32.totalorder %s41, 3
      %p430 = por %p428, %p429
      %p431 = scmp.ne.s32.totalorder %s420, %s421
      %p432 = scmp.eq.s32.totalorder %s41, 0
      %p433 = por %p431, %p432
      %p434 = scmp.ne.s32.totalorder %s420, %s421
      %p435 = scmp.eq.s32.totalorder %s42, 3
      %p436 = por %p434, %p435
      %p438 = scmp.ne.s32.totalorder %s421, %s437
      %p439 = scmp.eq.s32.totalorder %s42, 0
      %p440 = por %p438, %p439
      %s441 = ssub.s32 %s43, %s55
      %p442 = scmp.eq.s32.totalorder %s441, 0
      %s444 = sadd.s32 %s443, 1
      %s445 = scalar_select %p442, %s443, %s444
      %p448 = pneg %p442
      %p449 = scmp.eq.s32.totalorder %s36, 3
      %p450 = por %p448, %p449
      %p451 = scmp.ne.s32.totalorder %s443, %s446
      %p452 = scmp.eq.s32.totalorder %s36, 0
      %p453 = por %p451, %p452
      %p454 = scmp.ne.s32.totalorder %s443, %s446
      %p455 = scmp.eq.s32.totalorder %s41, 3
      %p456 = por %p454, %p455
      %p457 = scmp.ne.s32.totalorder %s446, %s447
      %p458 = scmp.eq.s32.totalorder %s41, 0
      %p459 = por %p457, %p458
      %p460 = scmp.ne.s32.totalorder %s446, %s447
      %p461 = scmp.eq.s32.totalorder %s42, 3
      %p462 = por %p460, %p461
      %p464 = scmp.ne.s32.totalorder %s447, %s463
      %p465 = scmp.eq.s32.totalorder %s42, 0
      %p466 = por %p464, %p465
      %p467 = scmp.le.s32.totalorder 1, %s36
      %p468 = scmp.lt.s32.totalorder %s36, 5
      %p469 = pnand %p467, %p468
      %p470 = pneg %p469
      // Predicated region
      $region9: #{_lambda_.1} parent=5 // pred_check
        _
      $region10: #{_lambda_.1} parent=5 // pred_check_branch
        %472 = sbr.rel (%p469) target = $region12
      $region11: #{_lambda_.1} parent=5 // pred_region
        %s473 = ssub.s32 %s36, 1
        // Predicated region
        $region13: #{_lambda_.1} parent=11 // pred_check
          %p474 = pneg %p95
        $region14: #{_lambda_.1} parent=11 // pred_check_branch
          %476 = sbr.rel (%p474) target = $region16
        $region15: #{_lambda_.1} parent=11 // pred_region
          _
        $region16: #{_lambda_.1} parent=11 // pred_fallthru
          _
      $region12: #{_lambda_.1} parent=5 // pred_fallthru
        _
      %p477 = scmp.lt.s32.totalorder %s36, 4
      // Predicated region
      $region17: #{_lambda_.1} parent=5 // pred_check
        %p478 = pneg %p477
      $region18: #{_lambda_.1} parent=5 // pred_check_branch
        %480 = sbr.rel (%p478) target = $region20
      $region19: #{_lambda_.1} parent=5 // pred_region
        // Predicated region
        $region21: #{_lambda_.1} parent=19 // pred_check
          %p481 = pneg %p68
        $region22: #{_lambda_.1} parent=19 // pred_check_branch
          %483 = sbr.rel (%p481) target = $region24
        $region23: #{_lambda_.1} parent=19 // pred_region
          %p484 = scmp.lt.s32.totalorder %s43, 1
          %s485 = scalar_select %p484, %s43, 1
          %s486 = smul.addr %s485, 8
          %s487 = scalar_lea.vmem %s0, %s486
        $region24: #{_lambda_.1} parent=19 // pred_fallthru
          _
        // Predicated region
        $region25: #{_lambda_.1} parent=19 // pred_check
          %p488 = pneg %p115
        $region26: #{_lambda_.1} parent=19 // pred_check_branch
          %490 = sbr.rel (%p488) target = $region28
        $region27: #{_lambda_.1} parent=19 // pred_region
          %p491 = scmp.lt.s32.totalorder %s43, 1
          %s492 = scalar_select %p491, %s43, 1
          %s493 = scalar_lea.vmem %s2, %s492
        $region28: #{_lambda_.1} parent=19 // pred_fallthru
          _
        // Predicated region
        $region29: #{_lambda_.1} parent=19 // pred_check
          %p494 = pneg %p141
        $region30: #{_lambda_.1} parent=19 // pred_check_branch
          %496 = sbr.rel (%p494) target = $region32
        $region31: #{_lambda_.1} parent=19 // pred_region
          %s497 = sand.u32 %s131, 1
          %s498 = scalar_lea.sflag [#allocation4], %s497
          %s499 = sand.u32 %s131, 1
          %s500 = smul.addr %s499, 128
          %s501 = scalar_lea.vmem [#allocation3], %s500
          %503 = vsyncadd %s498, 0
          %s504 = smul.addr %s44, 16
          %s505 = smul.addr %s504, 8
          %s506 = scalar_lea.hbm %s3, %s505
          %s507 = sshll.u32 %s506, 4
          %s508 = int_to_ptr.hbm [resolvable:$true] %s507
          %s509 = sshll.u32 %s501, 4
          %s510 = int_to_ptr.vmem [resolvable:$true] %s509
          %515 = dma.hbm_to_vmem [thread:$0]  %s508, 2048, %s510, %s498, 128, 128, 8
        $region32: #{_lambda_.1} parent=19 // pred_fallthru
          _
        // Predicated region
        $region33: #{_lambda_.1} parent=19 // pred_check
          %p516 = pneg %p167
        $region34: #{_lambda_.1} parent=19 // pred_check_branch
          %518 = sbr.rel (%p516) target = $region36
        $region35: #{_lambda_.1} parent=19 // pred_region
          %p519 = scmp.lt.s32.totalorder %s44, 1
          %s520 = scalar_select %p519, %s44, 1
          %s521 = smul.addr %s520, 4
          %s522 = scalar_lea.vmem %s4, %s521
        $region36: #{_lambda_.1} parent=19 // pred_fallthru
          _
        // Predicated region
        $region37: #{_lambda_.1} parent=19 // pred_check
          %p523 = pneg %p193
        $region38: #{_lambda_.1} parent=19 // pred_check_branch
          %525 = sbr.rel (%p523) target = $region40
        $region39: #{_lambda_.1} parent=19 // pred_region
          %p526 = scmp.lt.s32.totalorder %s44, 1
          %s527 = scalar_select %p526, %s44, 1
          %s528 = smul.addr %s527, 4
          %s529 = smul.addr %s528, 8
          %s530 = scalar_lea.vmem %s5, %s529
        $region40: #{_lambda_.1} parent=19 // pred_fallthru
          _
        // Predicated region
        $region41: #{_lambda_.1} parent=19 // pred_check
          %p531 = pneg %p219
        $region42: #{_lambda_.1} parent=19 // pred_check_branch
          %533 = sbr.rel (%p531) target = $region44
        $region43: #{_lambda_.1} parent=19 // pred_region
          %p534 = scmp.lt.s32.totalorder %s44, 1
          %s535 = scalar_select %p534, %s44, 1
          %s536 = scalar_lea.vmem %s6, %s535
        $region44: #{_lambda_.1} parent=19 // pred_fallthru
          _
        // Predicated region
        $region45: #{_lambda_.1} parent=19 // pred_check
          %p537 = pneg %p245
        $region46: #{_lambda_.1} parent=19 // pred_check_branch
          %539 = sbr.rel (%p537) target = $region48
        $region47: #{_lambda_.1} parent=19 // pred_region
          %s540 = sand.u32 %s36, 1
          %s541 = scalar_lea.sflag [#allocation6], %s540
          %s542 = sand.u32 %s235, 1
          %s543 = scalar_lea.vmem [#allocation5], %s542
          %545 = vsyncadd %s541, 0
          %s546 = scalar_lea.hbm %s7, %s44
          %s548 = sshll.u32 %s546, 4
          %s549 = int_to_ptr.hbm [resolvable:$true] %s548
          %s550 = sshll.u32 %s543, 4
          %s551 = int_to_ptr.vmem [resolvable:$true] %s550
          %553 = dma.hbm_to_vmem [thread:$0]  %s549, 16, %s551, %s541
        $region48: #{_lambda_.1} parent=19 // pred_fallthru
          _
        // Predicated region
        $region49: #{_lambda_.1} parent=19 // pred_check
          %p554 = pneg %p271
        $region50: #{_lambda_.1} parent=19 // pred_check_branch
          %556 = sbr.rel (%p554) target = $region52
        $region51: #{_lambda_.1} parent=19 // pred_region
          %s557 = sand.u32 %s36, 1
          %s558 = scalar_lea.sflag [#allocation6], %s557
          %s559 = sand.u32 %s261, 1
          %s560 = scalar_lea.vmem [#allocation7], %s559
          %562 = vsyncadd %s558, 0
          %s563 = scalar_lea.hbm %s8, %s44
          %s565 = sshll.u32 %s563, 4
          %s566 = int_to_ptr.hbm [resolvable:$true] %s565
          %s567 = sshll.u32 %s560, 4
          %s568 = int_to_ptr.vmem [resolvable:$true] %s567
          %570 = dma.hbm_to_vmem [thread:$0]  %s566, 16, %s568, %s558
        $region52: #{_lambda_.1} parent=19 // pred_fallthru
          _
        // Predicated region
        $region53: #{_lambda_.1} parent=19 // pred_check
          %p571 = pneg %p297
        $region54: #{_lambda_.1} parent=19 // pred_check_branch
          %573 = sbr.rel (%p571) target = $region56
        $region55: #{_lambda_.1} parent=19 // pred_region
          %s574 = sand.u32 %s36, 1
          %s575 = scalar_lea.sflag [#allocation9], %s574
          %s576 = sand.u32 %s287, 1
          %s577 = smul.addr %s576, 32
          %s578 = scalar_lea.vmem [#allocation8], %s577
          %580 = vsyncadd %s575, 0
          %s581 = smul.addr %s44, 4
          %s582 = smul.addr %s581, 8
          %s583 = scalar_lea.hbm %s9, %s582
          %s584 = sshll.u32 %s583, 4
          %s585 = int_to_ptr.hbm [resolvable:$true] %s584
          %s586 = sshll.u32 %s578, 4
          %s587 = int_to_ptr.vmem [resolvable:$true] %s586
          %592 = dma.hbm_to_vmem [thread:$0]  %s585, 512, %s587, %s575, 128, 128, 8
        $region56: #{_lambda_.1} parent=19 // pred_fallthru
          _
        // Predicated region
        $region57: #{_lambda_.1} parent=19 // pred_check
          %p593 = pneg %p323
        $region58: #{_lambda_.1} parent=19 // pred_check_branch
          %595 = sbr.rel (%p593) target = $region60
        $region59: #{_lambda_.1} parent=19 // pred_region
          %s596 = sand.u32 %s36, 1
          %s597 = scalar_lea.sflag [#allocation9], %s596
          %s598 = sand.u32 %s313, 1
          %s599 = scalar_lea.vmem [#allocation10], %s598
          %601 = vsyncadd %s597, 0
          %s602 = scalar_lea.hbm %s10, %s44
          %s604 = sshll.u32 %s602, 4
          %s605 = int_to_ptr.hbm [resolvable:$true] %s604
          %s606 = sshll.u32 %s599, 4
          %s607 = int_to_ptr.vmem [resolvable:$true] %s606
          %609 = dma.hbm_to_vmem [thread:$0]  %s605, 16, %s607, %s597
        $region60: #{_lambda_.1} parent=19 // pred_fallthru
          _
        // Predicated region
        $region61: #{_lambda_.1} parent=19 // pred_check
          %p610 = pneg %p349
        $region62: #{_lambda_.1} parent=19 // pred_check_branch
          %612 = sbr.rel (%p610) target = $region64
        $region63: #{_lambda_.1} parent=19 // pred_region
          %p613 = scmp.lt.s32.totalorder %s44, 1
          %s614 = scalar_select %p613, %s44, 1
          %s615 = smul.addr %s614, 8
          %s616 = smul.addr %s615, 8
          %s617 = scalar_lea.vmem %s11, %s616
        $region64: #{_lambda_.1} parent=19 // pred_fallthru
          _
        // Predicated region
        $region65: #{_lambda_.1} parent=19 // pred_check
          %p618 = pneg %p375
        $region66: #{_lambda_.1} parent=19 // pred_check_branch
          %620 = sbr.rel (%p618) target = $region68
        $region67: #{_lambda_.1} parent=19 // pred_region
          %s621 = sand.u32 %s36, 1
          %s622 = scalar_lea.sflag [#allocation12], %s621
          %s623 = sand.u32 %s365, 1
          %s624 = scalar_lea.vmem [#allocation11], %s623
          %626 = vsyncadd %s622, 0
          %s627 = scalar_lea.hbm %s12, %s44
          %s629 = sshll.u32 %s627, 4
          %s630 = int_to_ptr.hbm [resolvable:$true] %s629
          %s631 = sshll.u32 %s624, 4
          %s632 = int_to_ptr.vmem [resolvable:$true] %s631
          %634 = dma.hbm_to_vmem [thread:$0]  %s630, 16, %s632, %s622
        $region68: #{_lambda_.1} parent=19 // pred_fallthru
          _
        // Predicated region
        $region69: #{_lambda_.1} parent=19 // pred_check
          %p635 = pneg %p401
        $region70: #{_lambda_.1} parent=19 // pred_check_branch
          %637 = sbr.rel (%p635) target = $region72
        $region71: #{_lambda_.1} parent=19 // pred_region
          %s638 = sand.u32 %s36, 1
          %s639 = scalar_lea.sflag [#allocation12], %s638
          %s640 = sand.u32 %s391, 1
          %s641 = scalar_lea.vmem [#allocation13], %s640
          %643 = vsyncadd %s639, 0
          %s644 = scalar_lea.hbm %s13, %s44
          %s646 = sshll.u32 %s644, 4
          %s647 = int_to_ptr.hbm [resolvable:$true] %s646
          %s648 = sshll.u32 %s641, 4
          %s649 = int_to_ptr.vmem [resolvable:$true] %s648
          %651 = dma.hbm_to_vmem [thread:$0]  %s647, 16, %s649, %s639
        $region72: #{_lambda_.1} parent=19 // pred_fallthru
          _
        // Predicated region
        $region73: #{_lambda_.1} parent=19 // pred_check
          %p652 = pneg %p427
        $region74: #{_lambda_.1} parent=19 // pred_check_branch
          %654 = sbr.rel (%p652) target = $region76
        $region75: #{_lambda_.1} parent=19 // pred_region
          %s655 = sand.u32 %s417, 1
          %s656 = scalar_lea.sflag [#allocation15], %s655
          %s657 = sand.u32 %s417, 1
          %s658 = scalar_lea.vmem [#allocation14], %s657
          %660 = vsyncadd %s656, 0
          %s661 = scalar_lea.hbm %s14, %s44
          %s663 = sshll.u32 %s661, 4
          %s664 = int_to_ptr.hbm [resolvable:$true] %s663
          %s665 = sshll.u32 %s658, 4
          %s666 = int_to_ptr.vmem [resolvable:$true] %s665
          %668 = dma.hbm_to_vmem [thread:$0]  %s664, 16, %s666, %s656
        $region76: #{_lambda_.1} parent=19 // pred_fallthru
          _
      $region20: #{_lambda_.1} parent=5 // pred_fallthru
        _
      %p669 = scmp.le.s32.totalorder 1, %s36
      %p670 = scmp.lt.s32.totalorder %s36, 5
      %p671 = pnand %p669, %p670
      %p672 = pneg %p671
      // Predicated region
      $region77: #{_lambda_.1} parent=5 // pred_check
        _
      $region78: #{_lambda_.1} parent=5 // pred_check_branch
        %674 = sbr.rel (%p671) target = $region80
      $region79: #{_lambda_.1} parent=5 // pred_region
        %s675 = ssub.s32 %s36, 1
        %s676 = sand.u32 %s134, 1
        %s677 = scalar_lea.sflag [#allocation4], %s676
        %s678 = sand.u32 %s134, 1
        %s679 = smul.addr %s678, 128
        %s680 = scalar_lea.vmem [#allocation3], %s679
        // Predicated region
        $region81: #{_lambda_.1} parent=79 // pred_check
          %p681 = pneg %p147
        $region82: #{_lambda_.1} parent=79 // pred_check_branch
          %683 = sbr.rel (%p681) target = $region84
        $region83: #{_lambda_.1} parent=79 // pred_region
          %685 = dma.done %s677, 2048
        $region84: #{_lambda_.1} parent=79 // pred_fallthru
          _
        %s686 = sand.u32 %s41, 1
        %s687 = scalar_lea.sflag [#allocation6], %s686
        %s688 = sand.u32 %s238, 1
        %s689 = scalar_lea.vmem [#allocation5], %s688
        // Predicated region
        $region85: #{_lambda_.1} parent=79 // pred_check
          %p690 = pneg %p251
        $region86: #{_lambda_.1} parent=79 // pred_check_branch
          %692 = sbr.rel (%p690) target = $region88
        $region87: #{_lambda_.1} parent=79 // pred_region
          %694 = dma.done %s687, 16
        $region88: #{_lambda_.1} parent=79 // pred_fallthru
          _
        %s695 = sand.u32 %s41, 1
        %s696 = scalar_lea.sflag [#allocation6], %s695
        %s697 = sand.u32 %s264, 1
        %s698 = scalar_lea.vmem [#allocation7], %s697
        // Predicated region
        $region89: #{_lambda_.1} parent=79 // pred_check
          %p699 = pneg %p277
        $region90: #{_lambda_.1} parent=79 // pred_check_branch
          %701 = sbr.rel (%p699) target = $region92
        $region91: #{_lambda_.1} parent=79 // pred_region
          %703 = dma.done %s696, 16
        $region92: #{_lambda_.1} parent=79 // pred_fallthru
          _
        %s704 = sand.u32 %s41, 1
        %s705 = scalar_lea.sflag [#allocation9], %s704
        %s706 = sand.u32 %s290, 1
        %s707 = smul.addr %s706, 32
        %s708 = scalar_lea.vmem [#allocation8], %s707
        // Predicated region
        $region93: #{_lambda_.1} parent=79 // pred_check
          %p709 = pneg %p303
        $region94: #{_lambda_.1} parent=79 // pred_check_branch
          %711 = sbr.rel (%p709) target = $region96
        $region95: #{_lambda_.1} parent=79 // pred_region
          %713 = dma.done %s705, 512
        $region96: #{_lambda_.1} parent=79 // pred_fallthru
          _
        %s714 = sand.u32 %s41, 1
        %s715 = scalar_lea.sflag [#allocation9], %s714
        %s716 = sand.u32 %s316, 1
        %s717 = scalar_lea.vmem [#allocation10], %s716
        // Predicated region
        $region97: #{_lambda_.1} parent=79 // pred_check
          %p718 = pneg %p329
        $region98: #{_lambda_.1} parent=79 // pred_check_branch
          %720 = sbr.rel (%p718) target = $region100
        $region99: #{_lambda_.1} parent=79 // pred_region
          %722 = dma.done %s715, 16
        $region100: #{_lambda_.1} parent=79 // pred_fallthru
          _
        %s723 = sand.u32 %s41, 1
        %s724 = scalar_lea.sflag [#allocation12], %s723
        %s725 = sand.u32 %s368, 1
        %s726 = scalar_lea.vmem [#allocation11], %s725
        // Predicated region
        $region101: #{_lambda_.1} parent=79 // pred_check
          %p727 = pneg %p381
        $region102: #{_lambda_.1} parent=79 // pred_check_branch
          %729 = sbr.rel (%p727) target = $region104
        $region103: #{_lambda_.1} parent=79 // pred_region
          %731 = dma.done %s724, 16
        $region104: #{_lambda_.1} parent=79 // pred_fallthru
          _
        %s732 = sand.u32 %s41, 1
        %s733 = scalar_lea.sflag [#allocation12], %s732
        %s734 = sand.u32 %s394, 1
        %s735 = scalar_lea.vmem [#allocation13], %s734
        // Predicated region
        $region105: #{_lambda_.1} parent=79 // pred_check
          %p736 = pneg %p407
        $region106: #{_lambda_.1} parent=79 // pred_check_branch
          %738 = sbr.rel (%p736) target = $region108
        $region107: #{_lambda_.1} parent=79 // pred_region
          %740 = dma.done %s733, 16
        $region108: #{_lambda_.1} parent=79 // pred_fallthru
          _
        %s741 = sand.u32 %s420, 1
        %s742 = scalar_lea.sflag [#allocation15], %s741
        %s743 = sand.u32 %s420, 1
        %s744 = scalar_lea.vmem [#allocation14], %s743
        // Predicated region
        $region109: #{_lambda_.1} parent=79 // pred_check
          %p745 = pneg %p433
        $region110: #{_lambda_.1} parent=79 // pred_check_branch
          %747 = sbr.rel (%p745) target = $region112
        $region111: #{_lambda_.1} parent=79 // pred_region
          %749 = dma.done %s742, 16
        $region112: #{_lambda_.1} parent=79 // pred_fallthru
          _
        %p750 = scmp.lt.s32.totalorder %s45, 1
        %s751 = scalar_select %p750, %s45, 1
        %s752 = smul.addr %s751, 8
        %s753 = scalar_lea.vmem %s0, %s752
        %p754 = pneg %p74
        %p755 = pneg %p71
        %p756 = pneg %p95
        %p757 = pneg %p92
        %p758 = scmp.lt.s32.totalorder %s45, 1
        %s759 = scalar_select %p758, %s45, 1
        %s760 = scalar_lea.vmem %s2, %s759
        %p761 = pneg %p121
        %p762 = pneg %p118
        %s763 = sand.u32 %s134, 1
        %s764 = scalar_lea.sflag [#allocation4], %s763
        %s765 = sand.u32 %s134, 1
        %s766 = smul.addr %s765, 128
        %s767 = scalar_lea.vmem [#allocation3], %s766
        %p768 = pneg %p147
        %p769 = pneg %p144
        %p770 = scmp.lt.s32.totalorder %s46, 1
        %s771 = scalar_select %p770, %s46, 1
        %s772 = smul.addr %s771, 4
        %s773 = scalar_lea.vmem %s4, %s772
        %p774 = pneg %p173
        %p775 = pneg %p170
        %p776 = scmp.lt.s32.totalorder %s46, 1
        %s777 = scalar_select %p776, %s46, 1
        %s778 = smul.addr %s777, 4
        %s779 = smul.addr %s778, 8
        %s780 = scalar_lea.vmem %s5, %s779
        %p781 = pneg %p199
        %p782 = pneg %p196
        %p783 = scmp.lt.s32.totalorder %s46, 1
        %s784 = scalar_select %p783, %s46, 1
        %s785 = scalar_lea.vmem %s6, %s784
        %p786 = pneg %p225
        %p787 = pneg %p222
        %s788 = sand.u32 %s41, 1
        %s789 = scalar_lea.sflag [#allocation6], %s788
        %s790 = sand.u32 %s238, 1
        %s791 = scalar_lea.vmem [#allocation5], %s790
        %p792 = pneg %p251
        %p793 = pneg %p248
        %s794 = sand.u32 %s41, 1
        %s795 = scalar_lea.sflag [#allocation6], %s794
        %s796 = sand.u32 %s264, 1
        %s797 = scalar_lea.vmem [#allocation7], %s796
        %p798 = pneg %p277
        %p799 = pneg %p274
        %s800 = sand.u32 %s41, 1
        %s801 = scalar_lea.sflag [#allocation9], %s800
        %s802 = sand.u32 %s290, 1
        %s803 = smul.addr %s802, 32
        %s804 = scalar_lea.vmem [#allocation8], %s803
        %p805 = pneg %p303
        %p806 = pneg %p300
        %s807 = sand.u32 %s41, 1
        %s808 = scalar_lea.sflag [#allocation9], %s807
        %s809 = sand.u32 %s316, 1
        %s810 = scalar_lea.vmem [#allocation10], %s809
        %p811 = pneg %p329
        %p812 = pneg %p326
        %p813 = scmp.lt.s32.totalorder %s46, 1
        %s814 = scalar_select %p813, %s46, 1
        %s815 = smul.addr %s814, 8
        %s816 = smul.addr %s815, 8
        %s817 = scalar_lea.vmem %s11, %s816
        %p818 = pneg %p355
        %p819 = pneg %p352
        %s820 = sand.u32 %s41, 1
        %s821 = scalar_lea.sflag [#allocation12], %s820
        %s822 = sand.u32 %s368, 1
        %s823 = scalar_lea.vmem [#allocation11], %s822
        %p824 = pneg %p381
        %p825 = pneg %p378
        %s826 = sand.u32 %s41, 1
        %s827 = scalar_lea.sflag [#allocation12], %s826
        %s828 = sand.u32 %s394, 1
        %s829 = scalar_lea.vmem [#allocation13], %s828
        %p830 = pneg %p407
        %p831 = pneg %p404
        %s832 = sand.u32 %s420, 1
        %s833 = scalar_lea.sflag [#allocation15], %s832
        %s834 = sand.u32 %s420, 1
        %s835 = scalar_lea.vmem [#allocation14], %s834
        %p836 = pneg %p433
        %p837 = pneg %p430
        %p838 = pneg %p459
        %p839 = pneg %p456
        %p840 = scmp.lt.s32.totalorder %s45, 1
        %s841 = scalar_select %p840, %s45, 1
        %s842 = smul.addr %s841, 8
        %s843 = scalar_lea.vmem %s15, %s842
        %p844 = scmp.lt.s32.totalorder %s45, 1
        %s845 = scalar_select %p844, %s45, 1
        %s846 = smul.addr %s845, 8
        %s847 = scalar_lea.vmem %s0, %s846
        %p848 = scmp.lt.s32.totalorder %s45, 1
        %s849 = scalar_select %p848, %s45, 1
        %s850 = scalar_lea.vmem %s2, %s849
        %p851 = scmp.lt.s32.totalorder %s46, 1
        %s852 = scalar_select %p851, %s46, 1
        %s853 = smul.addr %s852, 4
        %s854 = scalar_lea.vmem %s4, %s853
        %p855 = scmp.lt.s32.totalorder %s46, 1
        %s856 = scalar_select %p855, %s46, 1
        %s857 = smul.addr %s856, 4
        %s858 = smul.addr %s857, 8
        %s859 = scalar_lea.vmem %s5, %s858
        %p860 = scmp.lt.s32.totalorder %s46, 1
        %s861 = scalar_select %p860, %s46, 1
        %s862 = scalar_lea.vmem %s6, %s861
        %p863 = scmp.lt.s32.totalorder %s46, 1
        %s864 = scalar_select %p863, %s46, 1
        %s865 = smul.addr %s864, 8
        %s866 = smul.addr %s865, 8
        %s867 = scalar_lea.vmem %s11, %s866
        %p868 = scmp.lt.s32.totalorder %s45, 1
        %s869 = scalar_select %p868, %s45, 1
        %s870 = smul.addr %s869, 8
        %s871 = scalar_lea.vmem %s15, %s870
        %p872 = scmp.eq.s32.totalorder %s46, 0
        // Predicated region
        $region113: #{_lambda_.1} parent=79 // pred_check
          %p873 = pneg %p872
        $region114: #{_lambda_.1} parent=79 // pred_check_branch
          %875 = sbr.rel (%p873) target = $region116
        $region115: #{_lambda_.1} parent=79 // pred_region
          %v876 = vld [vmem:[%s847] sm:$0xff]
          %v877 = vmul.f32 %v876, 5.656854
          %v878 = vld [vmem:[%s1] sm:$0xff]
          %v879 = vadd.f32 %v877, %v878
          %vm880 = vcmask 261120
          %881 = vst.msk [vmem:[#allocation2] sm:$0xff] %vm880, %v879
        $region116: #{_lambda_.1} parent=79 // pred_fallthru
          _
        %v882 = vld [vmem:[#allocation2] sm:$0xff]
        %v883 = vld [vmem:[%s680] sm:$0xff]
        %v884 = vld [vmem:[%s680 + $0x8] sm:$0xff]
        %v885 = vld [vmem:[%s680 + $0x10] sm:$0xff]
        %v886 = vld [vmem:[%s680 + $0x18] sm:$0xff]
        %v887 = vld [vmem:[%s680 + $0x20] sm:$0xff]
        %v888 = vld [vmem:[%s680 + $0x28] sm:$0xff]
        %v889 = vld [vmem:[%s680 + $0x30] sm:$0xff]
        %v890 = vld [vmem:[%s680 + $0x38] sm:$0xff]
        %v891 = vld [vmem:[%s680 + $0x40] sm:$0xff]
        %v892 = vld [vmem:[%s680 + $0x48] sm:$0xff]
        %v893 = vld [vmem:[%s680 + $0x50] sm:$0xff]
        %v894 = vld [vmem:[%s680 + $0x58] sm:$0xff]
        %v895 = vld [vmem:[%s680 + $0x60] sm:$0xff]
        %v896 = vld [vmem:[%s680 + $0x68] sm:$0xff]
        %v897 = vld [vmem:[%s680 + $0x70] sm:$0xff]
        %v898 = vld [vmem:[%s680 + $0x78] sm:$0xff]
        %v899 = vld [vmem:[%s854] sm:$0x1]
        %v900 = vld [vmem:[%s854 + $0x1] sm:$0x1]
        %v901 = vld [vmem:[%s854 + $0x2] sm:$0x1]
        %v902 = vld [vmem:[%s854 + $0x3] sm:$0x1]
        %v907 = vperm.slane %v899, 0
        %v908 = vperm.slane %v900, 0
        %v909 = vperm.slane %v901, 0
        %v910 = vperm.slane %v902, 0
        %vm915 = vcmask 261120
        %v917 = vsel %vm915, %v882, 0
        %919 = vmatpush.msra.mxu0 0.0
        %920 = vmatpush.msra.mxu0 0.0
        %921 = vmatpush.msra.mxu0 0.0
        %922 = vmatpush.msra.mxu0 0.0
        %923 = vmatpush.msra.mxu0 0.0
        %924 = vmatpush.msra.mxu0 0.0
        %925 = vmatpush.msra.mxu0 0.0
        %926 = vmatpush.msra.mxu0 0.0
        %927 = vmatpush.msra.mxu0 0.0
        %928 = vmatpush.msra.mxu0 0.0
        %929 = vmatpush.msra.mxu0 0.0
        %930 = vmatpush.msra.mxu0 0.0
        %931 = vmatpush.msra.mxu0 %v886
        %932 = vmatpush.msra.mxu0 %v885
        %933 = vmatpush.msra.mxu0 %v884
        %934 = vmatpush.msra.mxu0 %v883
        %935 = vmatmul.f32.gmra.mxu0 %v917
        %v936 = vpop.f32.mrf.mxu0
        %v937 = vadd.f32 %v907, %v936
        %938 = vdwg.mxu0
        %939 = vmatpush.msra.mxu0 0.0
        %940 = vmatpush.msra.mxu0 0.0
        %941 = vmatpush.msra.mxu0 0.0
        %942 = vmatpush.msra.mxu0 0.0
        %943 = vmatpush.msra.mxu0 0.0
        %944 = vmatpush.msra.mxu0 0.0
        %945 = vmatpush.msra.mxu0 0.0
        %946 = vmatpush.msra.mxu0 0.0
        %947 = vmatpush.msra.mxu0 0.0
        %948 = vmatpush.msra.mxu0 0.0
        %949 = vmatpush.msra.mxu0 0.0
        %950 = vmatpush.msra.mxu0 0.0
        %951 = vmatpush.msra.mxu0 %v890
        %952 = vmatpush.msra.mxu0 %v889
        %953 = vmatpush.msra.mxu0 %v888
        %954 = vmatpush.msra.mxu0 %v887
        %955 = vmatmul.f32.gmra.mxu0 %v917
        %v956 = vpop.f32.mrf.mxu0
        %v957 = vadd.f32 %v908, %v956
        %958 = vdwg.mxu0
        %959 = vmatpush.msra.mxu0 0.0
        %960 = vmatpush.msra.mxu0 0.0
        %961 = vmatpush.msra.mxu0 0.0
        %962 = vmatpush.msra.mxu0 0.0
        %963 = vmatpush.msra.mxu0 0.0
        %964 = vmatpush.msra.mxu0 0.0
        %965 = vmatpush.msra.mxu0 0.0
        %966 = vmatpush.msra.mxu0 0.0
        %967 = vmatpush.msra.mxu0 0.0
        %968 = vmatpush.msra.mxu0 0.0
        %969 = vmatpush.msra.mxu0 0.0
        %970 = vmatpush.msra.mxu0 0.0
        %971 = vmatpush.msra.mxu0 %v894
        %972 = vmatpush.msra.mxu0 %v893
        %973 = vmatpush.msra.mxu0 %v892
        %974 = vmatpush.msra.mxu0 %v891
        %975 = vmatmul.f32.gmra.mxu0 %v917
        %v976 = vpop.f32.mrf.mxu0
        %v977 = vadd.f32 %v909, %v976
        %978 = vdwg.mxu0
        %979 = vmatpush.msra.mxu0 0.0
        %980 = vmatpush.msra.mxu0 0.0
        %981 = vmatpush.msra.mxu0 0.0
        %982 = vmatpush.msra.mxu0 0.0
        %983 = vmatpush.msra.mxu0 0.0
        %984 = vmatpush.msra.mxu0 0.0
        %985 = vmatpush.msra.mxu0 0.0
        %986 = vmatpush.msra.mxu0 0.0
        %987 = vmatpush.msra.mxu0 0.0
        %988 = vmatpush.msra.mxu0 0.0
        %989 = vmatpush.msra.mxu0 0.0
        %990 = vmatpush.msra.mxu0 0.0
        %991 = vmatpush.msra.mxu0 %v898
        %992 = vmatpush.msra.mxu0 %v897
        %993 = vmatpush.msra.mxu0 %v896
        %994 = vmatpush.msra.mxu0 %v895
        %995 = vmatmul.f32.gmra.mxu0 %v917
        %v996 = vpop.f32.mrf.mxu0
        %v997 = vadd.f32 %v910, %v996
        %998 = vdwg.mxu0
        %1000 = vrot.lane.b32.xlu0 %v937, 120
        %v1001 = vpop.permute.xlu0 %1000
        %vm1002 = vcmask 64512
        %v1003 = vsel %vm1002, %v937, 0
        %v1005 = vsel %vm1002, %v1001, 0
        %1007 = vmatpush.xpose.msra.mxu0 0.0
        %1008 = vmatpush.xpose.msra.mxu0 0.0
        %1009 = vmatpush.xpose.msra.mxu0 0.0
        %1010 = vmatpush.xpose.msra.mxu0 0.0
        %1011 = vmatpush.xpose.msra.mxu0 0.0
        %1012 = vmatpush.xpose.msra.mxu0 0.0
        %1013 = vmatpush.xpose.msra.mxu0 0.0
        %1014 = vmatpush.xpose.msra.mxu0 0.0
        %1015 = vmatpush.xpose.msra.mxu0 0.0
        %1016 = vmatpush.xpose.msra.mxu0 0.0
        %1017 = vmatpush.xpose.msra.mxu0 0.0
        %1018 = vmatpush.xpose.msra.mxu0 0.0
        %1019 = vmatpush.xpose.msra.mxu0 0.0
        %1020 = vmatpush.xpose.msra.mxu0 0.0
        %1021 = vmatpush.xpose.msra.mxu0 0.0
        %1022 = vmatpush.xpose.msra.mxu0 %v1005
        %1023 = vmatmul.f32.gmra.mxu0 %v1003
        %v1024 = vpop.f32.mrf.mxu0
        %v1025 = vadd.f32 0.0, %v1024
        %1026 = vdwg.mxu0
        %1028 = vrot.lane.b32.xlu0 %v957, 120
        %v1029 = vpop.permute.xlu0 %1028
        %v1030 = vsel %vm1002, %v957, 0
        %v1032 = vsel %vm1002, %v1029, 0
        %1034 = vmatpush.xpose.msra.mxu0 0.0
        %1035 = vmatpush.xpose.msra.mxu0 0.0
        %1036 = vmatpush.xpose.msra.mxu0 0.0
        %1037 = vmatpush.xpose.msra.mxu0 0.0
        %1038 = vmatpush.xpose.msra.mxu0 0.0
        %1039 = vmatpush.xpose.msra.mxu0 0.0
        %1040 = vmatpush.xpose.msra.mxu0 0.0
        %1041 = vmatpush.xpose.msra.mxu0 0.0
        %1042 = vmatpush.xpose.msra.mxu0 0.0
        %1043 = vmatpush.xpose.msra.mxu0 0.0
        %1044 = vmatpush.xpose.msra.mxu0 0.0
        %1045 = vmatpush.xpose.msra.mxu0 0.0
        %1046 = vmatpush.xpose.msra.mxu0 0.0
        %1047 = vmatpush.xpose.msra.mxu0 0.0
        %1048 = vmatpush.xpose.msra.mxu0 0.0
        %1049 = vmatpush.xpose.msra.mxu0 %v1032
        %1050 = vmatmul.f32.gmra.mxu0 %v1030
        %v1051 = vpop.f32.mrf.mxu0
        %v1052 = vadd.f32 0.0, %v1051
        %1053 = vdwg.mxu0
        %1055 = vrot.lane.b32.xlu0 %v977, 120
        %v1056 = vpop.permute.xlu0 %1055
        %v1057 = vsel %vm1002, %v977, 0
        %v1059 = vsel %vm1002, %v1056, 0
        %1061 = vmatpush.xpose.msra.mxu0 0.0
        %1062 = vmatpush.xpose.msra.mxu0 0.0
        %1063 = vmatpush.xpose.msra.mxu0 0.0
        %1064 = vmatpush.xpose.msra.mxu0 0.0
        %1065 = vmatpush.xpose.msra.mxu0 0.0
        %1066 = vmatpush.xpose.msra.mxu0 0.0
        %1067 = vmatpush.xpose.msra.mxu0 0.0
        %1068 = vmatpush.xpose.msra.mxu0 0.0
        %1069 = vmatpush.xpose.msra.mxu0 0.0
        %1070 = vmatpush.xpose.msra.mxu0 0.0
        %1071 = vmatpush.xpose.msra.mxu0 0.0
        %1072 = vmatpush.xpose.msra.mxu0 0.0
        %1073 = vmatpush.xpose.msra.mxu0 0.0
        %1074 = vmatpush.xpose.msra.mxu0 0.0
        %1075 = vmatpush.xpose.msra.mxu0 0.0
        %1076 = vmatpush.xpose.msra.mxu0 %v1059
        %1077 = vmatmul.f32.gmra.mxu0 %v1057
        %v1078 = vpop.f32.mrf.mxu0
        %v1079 = vadd.f32 0.0, %v1078
        %1080 = vdwg.mxu0
        %1082 = vrot.lane.b32.xlu0 %v997, 120
        %v1083 = vpop.permute.xlu0 %1082
        %v1084 = vsel %vm1002, %v997, 0
        %v1086 = vsel %vm1002, %v1083, 0
        %1088 = vmatpush.xpose.msra.mxu0 0.0
        %1089 = vmatpush.xpose.msra.mxu0 0.0
        %1090 = vmatpush.xpose.msra.mxu0 0.0
        %1091 = vmatpush.xpose.msra.mxu0 0.0
        %1092 = vmatpush.xpose.msra.mxu0 0.0
        %1093 = vmatpush.xpose.msra.mxu0 0.0
        %1094 = vmatpush.xpose.msra.mxu0 0.0
        %1095 = vmatpush.xpose.msra.mxu0 0.0
        %1096 = vmatpush.xpose.msra.mxu0 0.0
        %1097 = vmatpush.xpose.msra.mxu0 0.0
        %1098 = vmatpush.xpose.msra.mxu0 0.0
        %1099 = vmatpush.xpose.msra.mxu0 0.0
        %1100 = vmatpush.xpose.msra.mxu0 0.0
        %1101 = vmatpush.xpose.msra.mxu0 0.0
        %1102 = vmatpush.xpose.msra.mxu0 0.0
        %1103 = vmatpush.xpose.msra.mxu0 %v1086
        %1104 = vmatmul.f32.gmra.mxu0 %v1084
        %v1105 = vpop.f32.mrf.mxu0
        %v1106 = vadd.f32 0.0, %v1105
        %1107 = vdwg.mxu0
        %v1108 = vmul.f32 %v1025, 0.35355338
        %v1109 = vmul.f32 %v1052, 0.35355338
        %v1110 = vmul.f32 %v1079, 0.35355338
        %v1111 = vmul.f32 %v1106, 0.35355338
        %v1112 = vld [vmem:[%s850] sm:$0x1]
        %v1114 = vperm.slane %v1112, 0
        %v1116 = vadd.f32 %v1108, %v1114
        %v1117 = vadd.f32 %v1109, %v1114
        %v1118 = vadd.f32 %v1110, %v1114
        %v1119 = vadd.f32 %v1111, %v1114
        %v1120 = vsel %vm1002, %v1116, -inf
        %1121 = vmax.xlane.f32.xlu0 %v1120
        %v1122 = vpop.xlane.xlu0 %1121
        %v1123 = vsel %vm1002, %v1117, -inf
        %1124 = vmax.xlane.f32.xlu0 %v1123
        %v1125 = vpop.xlane.xlu0 %1124
        %v1126 = vsel %vm1002, %v1118, -inf
        %1127 = vmax.xlane.f32.xlu0 %v1126
        %v1128 = vpop.xlane.xlu0 %1127
        %v1129 = vsel %vm1002, %v1119, -inf
        %1130 = vmax.xlane.f32.xlu0 %v1129
        %v1131 = vpop.xlane.xlu0 %1130
        %v1132 = vsub.f32 %v1116, %v1122
        %v1133 = vsub.f32 %v1117, %v1125
        %v1134 = vsub.f32 %v1118, %v1128
        %v1135 = vsub.f32 %v1119, %v1131
        %v1136 = vmul.f32 %v1132, 1.442695
        %v1137 = vpow.pop %v1136
        %v1138 = vmul.f32 %v1133, 1.442695
        %v1139 = vpow.pop %v1138
        %v1140 = vmul.f32 %v1134, 1.442695
        %v1141 = vpow.pop %v1140
        %v1142 = vmul.f32 %v1135, 1.442695
        %v1143 = vpow.pop %v1142
        %v1144 = vsel %vm1002, %v1137, 0.0
        %1145 = vadd.xlane.f32.xlu0 %v1144
        %v1146 = vpop.xlane.xlu0 %1145
        %v1147 = vsel %vm1002, %v1139, 0.0
        %1148 = vadd.xlane.f32.xlu0 %v1147
        %v1149 = vpop.xlane.xlu0 %1148
        %v1150 = vsel %vm1002, %v1141, 0.0
        %1151 = vadd.xlane.f32.xlu0 %v1150
        %v1152 = vpop.xlane.xlu0 %1151
        %v1153 = vsel %vm1002, %v1143, 0.0
        %1154 = vadd.xlane.f32.xlu0 %v1153
        %v1155 = vpop.xlane.xlu0 %1154
        %v1156 = vrcp.pop %v1146
        %v1157 = vrcp.pop %v1149
        %v1158 = vrcp.pop %v1152
        %v1159 = vrcp.pop %v1155
        %v1160 = vmul.f32 %v1137, %v1156
        %v1161 = vmul.f32 %v1139, %v1157
        %v1162 = vmul.f32 %v1141, %v1158
        %v1163 = vmul.f32 %v1143, %v1159
        %1164 = vrot.lane.b32.xlu0 %v937, 112
        %v1165 = vpop.permute.xlu0 %1164
        %v1168 = vsel %vm1002, %v1160, 0
        %1170 = vmatpush.msra.mxu0 0.0
        %1171 = vmatpush.msra.mxu0 0.0
        %1172 = vmatpush.msra.mxu0 0.0
        %1173 = vmatpush.msra.mxu0 0.0
        %1174 = vmatpush.msra.mxu0 0.0
        %1175 = vmatpush.msra.mxu0 0.0
        %1176 = vmatpush.msra.mxu0 0.0
        %1177 = vmatpush.msra.mxu0 0.0
        %1178 = vmatpush.msra.mxu0 0.0
        %1179 = vmatpush.msra.mxu0 0.0
        %1180 = vmatpush.msra.mxu0 0.0
        %1181 = vmatpush.msra.mxu0 0.0
        %1182 = vmatpush.msra.mxu0 0.0
        %1183 = vmatpush.msra.mxu0 0.0
        %1184 = vmatpush.msra.mxu0 0.0
        %1185 = vmatpush.msra.mxu0 %v1165
        %1186 = vmatmul.f32.gmra.mxu0 %v1168
        %v1187 = vpop.f32.mrf.mxu0
        %v1188 = vadd.f32 0.0, %v1187
        %1189 = vdwg.mxu0
        %1190 = vrot.lane.b32.xlu0 %v957, 112
        %v1191 = vpop.permute.xlu0 %1190
        %v1194 = vsel %vm1002, %v1161, 0
        %1196 = vmatpush.msra.mxu0 0.0
        %1197 = vmatpush.msra.mxu0 0.0
        %1198 = vmatpush.msra.mxu0 0.0
        %1199 = vmatpush.msra.mxu0 0.0
        %1200 = vmatpush.msra.mxu0 0.0
        %1201 = vmatpush.msra.mxu0 0.0
        %1202 = vmatpush.msra.mxu0 0.0
        %1203 = vmatpush.msra.mxu0 0.0
        %1204 = vmatpush.msra.mxu0 0.0
        %1205 = vmatpush.msra.mxu0 0.0
        %1206 = vmatpush.msra.mxu0 0.0
        %1207 = vmatpush.msra.mxu0 0.0
        %1208 = vmatpush.msra.mxu0 0.0
        %1209 = vmatpush.msra.mxu0 0.0
        %1210 = vmatpush.msra.mxu0 0.0
        %1211 = vmatpush.msra.mxu0 %v1191
        %1212 = vmatmul.f32.gmra.mxu0 %v1194
        %v1213 = vpop.f32.mrf.mxu0
        %v1214 = vadd.f32 0.0, %v1213
        %1215 = vdwg.mxu0
        %1216 = vrot.lane.b32.xlu0 %v977, 112
        %v1217 = vpop.permute.xlu0 %1216
        %v1220 = vsel %vm1002, %v1162, 0
        %1222 = vmatpush.msra.mxu0 0.0
        %1223 = vmatpush.msra.mxu0 0.0
        %1224 = vmatpush.msra.mxu0 0.0
        %1225 = vmatpush.msra.mxu0 0.0
        %1226 = vmatpush.msra.mxu0 0.0
        %1227 = vmatpush.msra.mxu0 0.0
        %1228 = vmatpush.msra.mxu0 0.0
        %1229 = vmatpush.msra.mxu0 0.0
        %1230 = vmatpush.msra.mxu0 0.0
        %1231 = vmatpush.msra.mxu0 0.0
        %1232 = vmatpush.msra.mxu0 0.0
        %1233 = vmatpush.msra.mxu0 0.0
        %1234 = vmatpush.msra.mxu0 0.0
        %1235 = vmatpush.msra.mxu0 0.0
        %1236 = vmatpush.msra.mxu0 0.0
        %1237 = vmatpush.msra.mxu0 %v1217
        %1238 = vmatmul.f32.gmra.mxu0 %v1220
        %v1239 = vpop.f32.mrf.mxu0
        %v1240 = vadd.f32 0.0, %v1239
        %1241 = vdwg.mxu0
        %1242 = vrot.lane.b32.xlu0 %v997, 112
        %v1243 = vpop.permute.xlu0 %1242
        %v1246 = vsel %vm1002, %v1163, 0
        %1248 = vmatpush.msra.mxu0 0.0
        %1249 = vmatpush.msra.mxu0 0.0
        %1250 = vmatpush.msra.mxu0 0.0
        %1251 = vmatpush.msra.mxu0 0.0
        %1252 = vmatpush.msra.mxu0 0.0
        %1253 = vmatpush.msra.mxu0 0.0
        %1254 = vmatpush.msra.mxu0 0.0
        %1255 = vmatpush.msra.mxu0 0.0
        %1256 = vmatpush.msra.mxu0 0.0
        %1257 = vmatpush.msra.mxu0 0.0
        %1258 = vmatpush.msra.mxu0 0.0
        %1259 = vmatpush.msra.mxu0 0.0
        %1260 = vmatpush.msra.mxu0 0.0
        %1261 = vmatpush.msra.mxu0 0.0
        %1262 = vmatpush.msra.mxu0 0.0
        %1263 = vmatpush.msra.mxu0 %v1243
        %1264 = vmatmul.f32.gmra.mxu0 %v1246
        %v1265 = vpop.f32.mrf.mxu0
        %v1266 = vadd.f32 0.0, %v1265
        %1267 = vdwg.mxu0
        %v1268 = vld [vmem:[%s859] sm:$0xff]
        %v1269 = vld [vmem:[%s859 + $0x8] sm:$0xff]
        %v1270 = vld [vmem:[%s859 + $0x10] sm:$0xff]
        %v1271 = vld [vmem:[%s859 + $0x18] sm:$0xff]
        %v1273 = vsel %vm1002, %v1188, 0
        %1275 = vmatpush.msra.mxu0 0.0
        %1276 = vmatpush.msra.mxu0 0.0
        %1277 = vmatpush.msra.mxu0 0.0
        %1278 = vmatpush.msra.mxu0 0.0
        %1279 = vmatpush.msra.mxu0 0.0
        %1280 = vmatpush.msra.mxu0 0.0
        %1281 = vmatpush.msra.mxu0 0.0
        %1282 = vmatpush.msra.mxu0 0.0
        %1283 = vmatpush.msra.mxu0 0.0
        %1284 = vmatpush.msra.mxu0 0.0
        %1285 = vmatpush.msra.mxu0 0.0
        %1286 = vmatpush.msra.mxu0 0.0
        %1287 = vmatpush.msra.mxu0 0.0
        %1288 = vmatpush.msra.mxu0 0.0
        %1289 = vmatpush.msra.mxu0 0.0
        %1290 = vmatpush.msra.mxu0 %v1268
        %1291 = vmatmul.f32.gmra.mxu0 %v1273
        %v1292 = vpop.f32.mrf.mxu0
        %v1293 = vadd.f32 0.0, %v1292
        %1294 = vdwg.mxu0
        %v1296 = vsel %vm1002, %v1214, 0
        %1298 = vmatpush.msra.mxu0 0.0
        %1299 = vmatpush.msra.mxu0 0.0
        %1300 = vmatpush.msra.mxu0 0.0
        %1301 = vmatpush.msra.mxu0 0.0
        %1302 = vmatpush.msra.mxu0 0.0
        %1303 = vmatpush.msra.mxu0 0.0
        %1304 = vmatpush.msra.mxu0 0.0
        %1305 = vmatpush.msra.mxu0 0.0
        %1306 = vmatpush.msra.mxu0 0.0
        %1307 = vmatpush.msra.mxu0 0.0
        %1308 = vmatpush.msra.mxu0 0.0
        %1309 = vmatpush.msra.mxu0 0.0
        %1310 = vmatpush.msra.mxu0 0.0
        %1311 = vmatpush.msra.mxu0 0.0
        %1312 = vmatpush.msra.mxu0 0.0
        %1313 = vmatpush.msra.mxu0 %v1269
        %1314 = vmatmul.f32.gmra.mxu0 %v1296
        %v1315 = vpop.f32.mrf.mxu0
        %v1316 = vadd.f32 0.0, %v1315
        %1317 = vdwg.mxu0
        %v1319 = vsel %vm1002, %v1240, 0
        %1321 = vmatpush.msra.mxu0 0.0
        %1322 = vmatpush.msra.mxu0 0.0
        %1323 = vmatpush.msra.mxu0 0.0
        %1324 = vmatpush.msra.mxu0 0.0
        %1325 = vmatpush.msra.mxu0 0.0
        %1326 = vmatpush.msra.mxu0 0.0
        %1327 = vmatpush.msra.mxu0 0.0
        %1328 = vmatpush.msra.mxu0 0.0
        %1329 = vmatpush.msra.mxu0 0.0
        %1330 = vmatpush.msra.mxu0 0.0
        %1331 = vmatpush.msra.mxu0 0.0
        %1332 = vmatpush.msra.mxu0 0.0
        %1333 = vmatpush.msra.mxu0 0.0
        %1334 = vmatpush.msra.mxu0 0.0
        %1335 = vmatpush.msra.mxu0 0.0
        %1336 = vmatpush.msra.mxu0 %v1270
        %1337 = vmatmul.f32.gmra.mxu0 %v1319
        %v1338 = vpop.f32.mrf.mxu0
        %v1339 = vadd.f32 0.0, %v1338
        %1340 = vdwg.mxu0
        %v1342 = vsel %vm1002, %v1266, 0
        %1344 = vmatpush.msra.mxu0 0.0
        %1345 = vmatpush.msra.mxu0 0.0
        %1346 = vmatpush.msra.mxu0 0.0
        %1347 = vmatpush.msra.mxu0 0.0
        %1348 = vmatpush.msra.mxu0 0.0
        %1349 = vmatpush.msra.mxu0 0.0
        %1350 = vmatpush.msra.mxu0 0.0
        %1351 = vmatpush.msra.mxu0 0.0
        %1352 = vmatpush.msra.mxu0 0.0
        %1353 = vmatpush.msra.mxu0 0.0
        %1354 = vmatpush.msra.mxu0 0.0
        %1355 = vmatpush.msra.mxu0 0.0
        %1356 = vmatpush.msra.mxu0 0.0
        %1357 = vmatpush.msra.mxu0 0.0
        %1358 = vmatpush.msra.mxu0 0.0
        %1359 = vmatpush.msra.mxu0 %v1271
        %1360 = vmatmul.f32.gmra.mxu0 %v1342
        %v1361 = vpop.f32.mrf.mxu0
        %v1362 = vadd.f32 0.0, %v1361
        %1363 = vdwg.mxu0
        %v1364 = vsel %vm915, %v1293, 0.0
        %v1365 = vsel %vm915, %v1316, 0.0
        %v1366 = vadd.f32 %v1364, %v1365
        %v1367 = vsel %vm915, %v1339, 0.0
        %v1368 = vadd.f32 %v1366, %v1367
        %v1369 = vsel %vm915, %v1362, 0.0
        %v1370 = vadd.f32 %v1368, %v1369
        %v1371 = vld [vmem:[%s862] sm:$0x1]
        %v1373 = vperm.slane %v1371, 0
        %v1375 = vadd.f32 %v1370, %v1373
        %v1376 = vadd.f32 %v882, %v1375
        %v1377 = vsel %vm915, %v1376, 0.0
        %1378 = vadd.xlane.f32.xlu0 %v1377
        %v1379 = vpop.xlane.xlu0 %1378
        %v1380 = vrcp.pop 32.0
        %v1381 = vmul.f32 32.0, %v1380
        %v1382 = vsub.f32 1.0, %v1381
        %v1383 = vmul.f32 %v1380, %v1382
        %v1384 = vadd.f32 %v1380, %v1383
        %vm1385 = vweird.f32 %v1380
        %v1386 = vsel %vm1385, %v1380, %v1384
        %v1387 = vmul.f32 %v1379, %v1386
        %v1388 = vsub.f32 %v1376, %v1387
        %v1389 = vmul.f32 %v1388, %v1388
        %v1390 = vsel %vm915, %v1389, 0.0
        %1391 = vadd.xlane.f32.xlu0 %v1390
        %v1392 = vpop.xlane.xlu0 %1391
        %v1393 = vmul.f32 %v1392, %v1386
        %v1394 = vadd.f32 %v1393, 1e-05
        %v1395 = vrsqrt.pop %v1394
        %v1396 = vmul.f32 %v1395, %v1394
        %v1397 = vmul.f32 %v1396, %v1395
        %v1398 = vmul.f32 0.5, %v1397
        %v1399 = vsub.f32 1.5, %v1398
        %v1400 = vmul.f32 %v1395, %v1399
        %vm1401 = vweird.f32 %v1394
        %vm1402 = vweird.f32 %v1395
        %vm1403 = vmor %vm1401, %vm1402
        %v1404 = vsel %vm1403, %v1395, %v1400
        %v1405 = vmul.f32 %v1388, %v1404
        %v1406 = vld [vmem:[%s689] sm:$0x1]
        %v1408 = vperm.slane %v1406, 0
        %v1410 = vmul.f32 %v1405, %v1408
        %v1411 = vld [vmem:[%s698] sm:$0x1]
        %v1413 = vperm.slane %v1411, 0
        %v1415 = vadd.f32 %v1410, %v1413
        %v1416 = vld [vmem:[%s708] sm:$0xff]
        %v1417 = vld [vmem:[%s708 + $0x8] sm:$0xff]
        %v1418 = vld [vmem:[%s708 + $0x10] sm:$0xff]
        %v1419 = vld [vmem:[%s708 + $0x18] sm:$0xff]
        %v1420 = vld [vmem:[%s717] sm:$0x1]
        %v1422 = vperm.slane %v1420, 0
        %v1425 = vsel %vm915, %v1415, 0
        %1427 = vmatpush.msra.mxu0 0.0
        %1428 = vmatpush.msra.mxu0 0.0
        %1429 = vmatpush.msra.mxu0 0.0
        %1430 = vmatpush.msra.mxu0 0.0
        %1431 = vmatpush.msra.mxu0 0.0
        %1432 = vmatpush.msra.mxu0 0.0
        %1433 = vmatpush.msra.mxu0 0.0
        %1434 = vmatpush.msra.mxu0 0.0
        %1435 = vmatpush.msra.mxu0 0.0
        %1436 = vmatpush.msra.mxu0 0.0
        %1437 = vmatpush.msra.mxu0 0.0
        %1438 = vmatpush.msra.mxu0 0.0
        %1439 = vmatpush.msra.mxu0 %v1419
        %1440 = vmatpush.msra.mxu0 %v1418
        %1441 = vmatpush.msra.mxu0 %v1417
        %1442 = vmatpush.msra.mxu0 %v1416
        %1443 = vmatmul.f32.gmra.mxu0 %v1425
        %v1444 = vpop.f32.mrf.mxu0
        %v1445 = vadd.f32 %v1422, %v1444
        %1446 = vdwg.mxu0
        %v1447 = vmax.f32 %v1445, 0.0
        %v1448 = vld [vmem:[%s867] sm:$0xff]
        %v1449 = vld [vmem:[%s867 + $0x8] sm:$0xff]
        %v1450 = vld [vmem:[%s867 + $0x10] sm:$0xff]
        %v1451 = vld [vmem:[%s867 + $0x18] sm:$0xff]
        %v1452 = vld [vmem:[%s867 + $0x20] sm:$0xff]
        %v1453 = vld [vmem:[%s867 + $0x28] sm:$0xff]
        %v1454 = vld [vmem:[%s867 + $0x30] sm:$0xff]
        %v1455 = vld [vmem:[%s867 + $0x38] sm:$0xff]
        %v1456 = vld [vmem:[%s726] sm:$0x1]
        %v1458 = vperm.slane %v1456, 0
        %vm1460 = vcmask 523264
        %v1462 = vsel %vm1460, %v1447, 0
        %1464 = vmatpush.msra.mxu0 0.0
        %1465 = vmatpush.msra.mxu0 0.0
        %1466 = vmatpush.msra.mxu0 0.0
        %1467 = vmatpush.msra.mxu0 0.0
        %1468 = vmatpush.msra.mxu0 0.0
        %1469 = vmatpush.msra.mxu0 0.0
        %1470 = vmatpush.msra.mxu0 0.0
        %1471 = vmatpush.msra.mxu0 0.0
        %1472 = vmatpush.msra.mxu0 %v1455
        %1473 = vmatpush.msra.mxu0 %v1454
        %1474 = vmatpush.msra.mxu0 %v1453
        %1475 = vmatpush.msra.mxu0 %v1452
        %1476 = vmatpush.msra.mxu0 %v1451
        %1477 = vmatpush.msra.mxu0 %v1450
        %1478 = vmatpush.msra.mxu0 %v1449
        %1479 = vmatpush.msra.mxu0 %v1448
        %1480 = vmatmul.f32.gmra.mxu0 %v1462
        %v1481 = vpop.f32.mrf.mxu0
        %v1482 = vadd.f32 %v1458, %v1481
        %1483 = vdwg.mxu0
        %v1484 = vadd.f32 %v1415, %v1482
        %v1485 = vsel %vm915, %v1484, 0.0
        %1486 = vadd.xlane.f32.xlu0 %v1485
        %v1487 = vpop.xlane.xlu0 %1486
        %v1488 = vmul.f32 %v1487, %v1386
        %v1489 = vsub.f32 %v1484, %v1488
        %v1490 = vmul.f32 %v1489, %v1489
        %v1491 = vsel %vm915, %v1490, 0.0
        %1492 = vadd.xlane.f32.xlu0 %v1491
        %v1493 = vpop.xlane.xlu0 %1492
        %v1494 = vmul.f32 %v1493, %v1386
        %v1495 = vadd.f32 %v1494, 1e-05
        %v1496 = vrsqrt.pop %v1495
        %v1497 = vmul.f32 %v1496, %v1495
        %v1498 = vmul.f32 %v1497, %v1496
        %v1499 = vmul.f32 0.5, %v1498
        %v1500 = vsub.f32 1.5, %v1499
        %v1501 = vmul.f32 %v1496, %v1500
        %vm1502 = vweird.f32 %v1495
        %vm1503 = vweird.f32 %v1496
        %vm1504 = vmor %vm1502, %vm1503
        %v1505 = vsel %vm1504, %v1496, %v1501
        %v1506 = vmul.f32 %v1489, %v1505
        %v1507 = vld [vmem:[%s735] sm:$0x1]
        %v1509 = vperm.slane %v1507, 0
        %v1511 = vmul.f32 %v1506, %v1509
        %v1512 = vld [vmem:[%s744] sm:$0x1]
        %v1514 = vperm.slane %v1512, 0
        %v1516 = vadd.f32 %v1511, %v1514
        %1517 = vst.msk [vmem:[#allocation2] sm:$0xff] %vm915, %v1516
        %p1518 = scmp.eq.s32.totalorder %s46, 1
        // Predicated region
        $region117: #{_lambda_.1} parent=79 // pred_check
          %p1519 = pneg %p1518
        $region118: #{_lambda_.1} parent=79 // pred_check_branch
          %1521 = sbr.rel (%p1519) target = $region120
        $region119: #{_lambda_.1} parent=79 // pred_region
          %1522 = vst.msk [vmem:[%s871] sm:$0xff] %vm915, %v1516
        $region120: #{_lambda_.1} parent=79 // pred_fallthru
          _
        %p1523 = scmp.lt.s32.totalorder %s45, 1
        %s1524 = scalar_select %p1523, %s45, 1
        %s1525 = smul.addr %s1524, 8
        %s1526 = scalar_lea.vmem %s15, %s1525
        // Predicated region
        $region121: #{_lambda_.1} parent=79 // pred_check
          %p1527 = pneg %p456
        $region122: #{_lambda_.1} parent=79 // pred_check_branch
          %1529 = sbr.rel (%p1527) target = $region124
        $region123: #{_lambda_.1} parent=79 // pred_region
          _
        $region124: #{_lambda_.1} parent=79 // pred_fallthru
          _
      $region80: #{_lambda_.1} parent=5 // pred_fallthru
        _
      %p1530 = scmp.le.s32.totalorder 2, %s36
      // Predicated region
      $region125: #{_lambda_.1} parent=5 // pred_check
        %p1531 = pneg %p1530
      $region126: #{_lambda_.1} parent=5 // pred_check_branch
        %1533 = sbr.rel (%p1531) target = $region128
      $region127: #{_lambda_.1} parent=5 // pred_region
        %s1534 = ssub.s32 %s36, 2
        // Predicated region
        $region129: #{_lambda_.1} parent=127 // pred_check
          %p1535 = pneg %p462
        $region130: #{_lambda_.1} parent=127 // pred_check_branch
          %1537 = sbr.rel (%p1535) target = $region132
        $region131: #{_lambda_.1} parent=127 // pred_region
          %p1538 = scmp.lt.s32.totalorder %s47, 1
          %s1539 = scalar_select %p1538, %s47, 1
          %s1540 = smul.addr %s1539, 8
          %s1541 = scalar_lea.vmem %s15, %s1540
        $region132: #{_lambda_.1} parent=127 // pred_fallthru
          _
      $region128: #{_lambda_.1} parent=5 // pred_fallthru
        _
    $region6: #{_lambda_.1} parent=1 // loop_footer
      %s40 = sadd.s32 1, %s36
    $region7: #{_lambda_.1} parent=1 // loop_footer_branch
      %35 = sbr.rel target = $region3
    $region8: #{_lambda_.1} parent=1 // loop_exit
      _
    %1542 = vsyncpa [#allocation4], 1
    %s1543 = scalar_lea.sflag [#allocation4], 1
    %1544 = vsyncpa %s1543, 1
    %1545 = vsyncpa [#allocation6], 1
    %s1546 = scalar_lea.sflag [#allocation6], 1
    %1547 = vsyncpa %s1546, 1
    %1548 = vsyncpa [#allocation9], 1
    %s1549 = scalar_lea.sflag [#allocation9], 1
    %1550 = vsyncpa %s1549, 1
    %1551 = vsyncpa [#allocation12], 1
    %s1552 = scalar_lea.sflag [#allocation12], 1
    %1553 = vsyncpa %s1552, 1
    %1554 = vsyncpa [#allocation15], 1
    %s1555 = scalar_lea.sflag [#allocation15], 1
    %1556 = vsyncpa %s1555, 1

</llo_original>
